<compile_context>
chip_gen: v7x
topology: tpu7x:2x2x1
jax: 0.10.0
libtpu: 0.0.40
codegen_flags: <defaults>
</compile_context>

<pallas_src>
import jax
import jax.numpy as jnp
from jax import lax
from jax.experimental import pallas as pl
from jax.experimental.pallas import tpu as pltpu


_H = 9            # neurons per hidden layer
_N_HIDDEN = 2     # number of 9->9 hidden Linear layers
_LANE = 128
_SUBLANE = 8
_CHUNK_ROWS = _SUBLANE   # (8,128) f32 == exactly one vreg per compute chunk
_N_PARAMS = 2 * _H + _N_HIDDEN * (_H * _H + _H) + (_H + 1)   # = 208


def _round_up(x, m):
    return (x + m - 1) // m * m


# ---------------------------------------------------------------------------
# Kernel factory: whole 1 -> 9 -> 9 -> 9 -> 1 tanh MLP, chunked over the tile.
# ---------------------------------------------------------------------------
def _make_kernel(rows_per_tile, hidden_dtype):
    n_chunks = rows_per_tile // _CHUNK_ROWS
    unroll = max(1, min(2, n_chunks))          # modest unroll, keeps vregs low
    cast_hidden = hidden_dtype != jnp.float32  # bf16 fast path (v6e/v7x only)

    def kernel(params_ref, x_ref, o_ref):
        # params_ref: (208,) f32 in SMEM (scalar-prefetch operand), packed as
        #             [w0, b0, w1^T, b1, w2^T, b2, w3, b3]
        #             (hidden weights (out,in): [j*H + k] = W[k -> j]).
        # x_ref/o_ref: (rows_per_tile, 128) f32 VMEM tiles; batch = rows x lanes.
        H = _H

        # --- Hoist all 208 SMEM scalar reads out of the chunk loop ---------
        off = 0
        w0 = [params_ref[off + j] for j in range(H)]
        b0 = [params_ref[off + H + j] for j in range(H)]
        off += 2 * H

        hidden = []
        for _ in range(_N_HIDDEN):
            if cast_hidden:
                w = [[params_ref[off + j * H + k].astype(hidden_dtype)
                      for k in range(H)] for j in range(H)]
                b = [params_ref[off + H * H + j].astype(hidden_dtype)
                     for j in range(H)]
            else:
                w = [[params_ref[off + j * H + k] for k in range(H)]
                     for j in range(H)]
                b = [params_ref[off + H * H + j] for j in range(H)]
            hidden.append((w, b))
            off += H * H + H

        w3 = [params_ref[off + k] for k in range(H)]
        b3 = params_ref[off + H]

        # --- (8,128) chunk loop over the tile -------------------------------
        def chunk_body(c, carry):
            r0 = pl.multiple_of(c * _CHUNK_ROWS, _CHUNK_ROWS)
            x = x_ref[pl.ds(r0, _CHUNK_ROWS), :]

            # Layer 0: 1 -> 9.  K=1 matmul == scalar-broadcast FMA (VPU) + tanh (EUP).
            h = [jnp.tanh(w0[j] * x + b0[j]) for j in range(H)]
            if cast_hidden:
                h = [hj.astype(hidden_dtype) for hj in h]

            # Hidden 9 -> 9 layers: unrolled scalar-broadcast multiply-adds.
            for (w, b) in hidden:
                new_h = []
                for j in range(H):
                    acc = w[j][0] * h[0]
                    for k in range(1, H):
                        acc = acc + w[j][k] * h[k]
                    new_h.append(jnp.tanh(acc + b[j]))
                h = new_h

            if cast_hidden:
                h = [hj.astype(jnp.float32) for hj in h]

            # Output layer 9 -> 1: 9-term weighted sum (f32).
            out = w3[0] * h[0]
            for k in range(1, H):
                out = out + w3[k] * h[k]
            out = out + b3

            o_ref[pl.ds(r0, _CHUNK_ROWS), :] = out.astype(o_ref.dtype)
            return carry

        lax.fori_loop(0, n_chunks, chunk_body, 0, unroll=unroll)

    return kernel


# ---------------------------------------------------------------------------
# Parameter packing: 8 tiny operands -> one flat f32[208] slab.
# ---------------------------------------------------------------------------
def pack_params(params):
    parts = [
        params["w0"].T.reshape(-1),   # (9,)  : w0[0, j]
        params["b0"].reshape(-1),     # (9,)
        params["w1"].T.reshape(-1),   # (81,) : [j*H + k] = w1[k, j]
        params["b1"].reshape(-1),     # (9,)
        params["w2"].T.reshape(-1),   # (81,)
        params["b2"].reshape(-1),     # (9,)
        params["w3"].T.reshape(-1),   # (9,)  : w3[k, 0]
        params["b3"].reshape(-1),     # (1,)
    ]
    packed = jnp.concatenate(parts).astype(jnp.float32)
    assert packed.shape == (_N_PARAMS,)
    return packed


# ---------------------------------------------------------------------------
# Wrapper: lane-dense batch tiling, balanced grid, conditional padding.
# ---------------------------------------------------------------------------
def pinn1d_forward(t, params, *, batch_tile=65536, hidden_dtype=jnp.float32):
    """t: (N, 1) float32.  Returns (N, 1) float32.

    batch_tile:   target batch elements per grid step (>=64K recommended).
    hidden_dtype: jnp.bfloat16 runs the 9x9 hidden layers in bf16 (v6e/v7x
                  fast path, ~1e-3 error); default f32 matches the reference.
    """
    N = t.shape[0]
    packed = pack_params(params)

    # Batch -> (rows, 128 lanes); rows per grid step must be a multiple of 8.
    rows_needed = _round_up(pl.cdiv(N, _LANE), _SUBLANE)
    target_rows = max(_SUBLANE, (batch_tile // _LANE) // _SUBLANE * _SUBLANE)
    if rows_needed <= target_rows:
        rows_per_tile = rows_needed                     # single step, small N
    else:
        # Balance tiles so the grid has >=2 (roughly equal) steps for large N
        # (lets v7x megacore shard the "parallel" axis across both TCs).
        n_tiles = pl.cdiv(rows_needed, target_rows)
        rows_per_tile = _round_up(pl.cdiv(rows_needed, n_tiles), _SUBLANE)
    n_rows = _round_up(rows_needed, rows_per_tile)
    n_pad = n_rows * _LANE
    grid = (n_rows // rows_per_tile,)

    x_flat = t.astype(jnp.float32).reshape(-1)
    if n_pad != N:                                      # skip pad when exact
        x_flat = jnp.pad(x_flat, (0, n_pad - N))
    x2d = x_flat.reshape(n_rows, _LANE)

    # ~360 flops, 27 tanh, 8 bytes of HBM traffic per batch element.
    cost = pl.CostEstimate(
        flops=360 * n_pad,
        transcendentals=(_N_HIDDEN + 1) * _H * n_pad,
        bytes_accessed=8 * n_pad + 4 * _N_PARAMS,
    )

    # Only raise the scoped-VMEM limit if huge tiles are requested (v5e's
    # default scoped VMEM is 16 MiB); default 64K-element tiles need ~1 MiB.
    per_buf = rows_per_tile * _LANE * 4
    compiler_kwargs = dict(dimension_semantics=("parallel",))
    vmem_need = 2 * 2 * per_buf + (1 << 20)   # in+out, double-buffered + slack
    if vmem_need > (12 << 20):
        compiler_kwargs["vmem_limit_bytes"] = int(min(vmem_need, 64 << 20))

    kernel = _make_kernel(rows_per_tile, hidden_dtype)

    out2d = pl.pallas_call(
        kernel,
        out_shape=jax.ShapeDtypeStruct((n_rows, _LANE), jnp.float32),
        grid_spec=pltpu.PrefetchScalarGridSpec(
            # Packed f32[208] weight/bias slab -> SMEM once, before the grid.
            num_scalar_prefetch=1,
            grid=grid,
            in_specs=[
                pl.BlockSpec((rows_per_tile, _LANE), lambda i, p: (i, 0)),
            ],
            out_specs=pl.BlockSpec((rows_per_tile, _LANE), lambda i, p: (i, 0)),
        ),
        compiler_params=pltpu.CompilerParams(**compiler_kwargs),
        cost_estimate=cost,
    )(packed, x2d)

    return out2d.reshape(-1)[:N].reshape(N, 1)


# ---------------------------------------------------------------------------
# Deterministic parameter init (xavier_normal_ weights, zero biases)
# ---------------------------------------------------------------------------
def init_params(key, n_hidden_layers=_N_HIDDEN, n_neurons=_H):
    dims = [1] + [n_neurons] * (n_hidden_layers + 1) + [1]
    params = {}
    keys = jax.random.split(key, len(dims) - 1)
    for li, (fan_in, fan_out) in enumerate(zip(dims[:-1], dims[1:])):
        std = (2.0 / (fan_in + fan_out)) ** 0.5
        w = std * jax.random.normal(keys[li], (fan_in, fan_out), jnp.float32)
        b = jnp.zeros((1, fan_out), jnp.float32)
        params[f"w{li}"] = w
        params[f"b{li}"] = b
    return params


def pinn1d_reference(t, params):
    h = jnp.tanh(t @ params["w0"] + params["b0"])
    h = jnp.tanh(h @ params["w1"] + params["b1"])
    h = jnp.tanh(h @ params["w2"] + params["b2"])
    return h @ params["w3"] + params["b3"]


if __name__ == "__main__":
    key = jax.random.PRNGKey(0)
    k_param, k_in1, k_in2 = jax.random.split(key, 3)

    params = init_params(k_param)

    # Small input: batch of 32 scalar time points, shape (32, 1).
    t_small = jax.random.uniform(k_in1, (32, 1), jnp.float32)
    out_small = jax.block_until_ready(pinn1d_forward(t_small, params))
    ref_small = pinn1d_reference(t_small, params)
    assert out_small.shape == (32, 1)
    assert jnp.allclose(out_small, ref_small, atol=1e-5, rtol=1e-5), \
        "small-batch mismatch vs reference"

    # Medium input with a reduced batch_tile to exercise the multi-step grid
    # (balanced tiles), the in-kernel chunk loop and the padded remainder path.
    t_med = jax.random.uniform(k_in2, (5000, 1), jnp.float32)
    out_med = jax.block_until_ready(
        pinn1d_forward(t_med, params, batch_tile=2048))
    ref_med = pinn1d_reference(t_med, params)
    assert out_med.shape == (5000, 1)
    assert jnp.allclose(out_med, ref_med, atol=1e-5, rtol=1e-5), \
        "medium-batch mismatch vs reference"

    print("KERNEL_OK")
</pallas_src>

<mosaic_0001>
module attributes {stable_mosaic.version = 11 : i64} {
  func.func @kernel(%arg0: i32, %arg1: memref<208xf32, #tpu.memory_space<smem>>, %arg2: memref<8x128xf32, #tpu.memory_space<vmem>>, %arg3: memref<8x128xf32, #tpu.memory_space<vmem>>) attributes {dimension_semantics = [#tpu.dimension_semantics<parallel>], iteration_bounds = array<i64: 1>, scalar_prefetch = 1 : i64, scratch_operands = 0 : i64, tpu.core_type = #tpu.core_type<tc>, window_params = [{transform_indices = @transform_0, window_bounds = array<i64: 8, 128>}, {transform_indices = @transform_1, window_bounds = array<i64: 8, 128>}]} {
    %c0 = arith.constant 0 : index
    %0 = memref.load %arg1[%c0] : memref<208xf32, #tpu.memory_space<smem>>
    %c1 = arith.constant 1 : index
    %1 = memref.load %arg1[%c1] : memref<208xf32, #tpu.memory_space<smem>>
    %c2 = arith.constant 2 : index
    %2 = memref.load %arg1[%c2] : memref<208xf32, #tpu.memory_space<smem>>
    %c3 = arith.constant 3 : index
    %3 = memref.load %arg1[%c3] : memref<208xf32, #tpu.memory_space<smem>>
    %c4 = arith.constant 4 : index
    %4 = memref.load %arg1[%c4] : memref<208xf32, #tpu.memory_space<smem>>
    %c5 = arith.constant 5 : index
    %5 = memref.load %arg1[%c5] : memref<208xf32, #tpu.memory_space<smem>>
    %c6 = arith.constant 6 : index
    %6 = memref.load %arg1[%c6] : memref<208xf32, #tpu.memory_space<smem>>
    %c7 = arith.constant 7 : index
    %7 = memref.load %arg1[%c7] : memref<208xf32, #tpu.memory_space<smem>>
    %c8 = arith.constant 8 : index
    %8 = memref.load %arg1[%c8] : memref<208xf32, #tpu.memory_space<smem>>
    %c9 = arith.constant 9 : index
    %9 = memref.load %arg1[%c9] : memref<208xf32, #tpu.memory_space<smem>>
    %c10 = arith.constant 10 : index
    %10 = memref.load %arg1[%c10] : memref<208xf32, #tpu.memory_space<smem>>
    %c11 = arith.constant 11 : index
    %11 = memref.load %arg1[%c11] : memref<208xf32, #tpu.memory_space<smem>>
    %c12 = arith.constant 12 : index
    %12 = memref.load %arg1[%c12] : memref<208xf32, #tpu.memory_space<smem>>
    %c13 = arith.constant 13 : index
    %13 = memref.load %arg1[%c13] : memref<208xf32, #tpu.memory_space<smem>>
    %c14 = arith.constant 14 : index
    %14 = memref.load %arg1[%c14] : memref<208xf32, #tpu.memory_space<smem>>
    %c15 = arith.constant 15 : index
    %15 = memref.load %arg1[%c15] : memref<208xf32, #tpu.memory_space<smem>>
    %c16 = arith.constant 16 : index
    %16 = memref.load %arg1[%c16] : memref<208xf32, #tpu.memory_space<smem>>
    %c17 = arith.constant 17 : index
    %17 = memref.load %arg1[%c17] : memref<208xf32, #tpu.memory_space<smem>>
    %c18 = arith.constant 18 : index
    %18 = memref.load %arg1[%c18] : memref<208xf32, #tpu.memory_space<smem>>
    %c19 = arith.constant 19 : index
    %19 = memref.load %arg1[%c19] : memref<208xf32, #tpu.memory_space<smem>>
    %c20 = arith.constant 20 : index
    %20 = memref.load %arg1[%c20] : memref<208xf32, #tpu.memory_space<smem>>
    %c21 = arith.constant 21 : index
    %21 = memref.load %arg1[%c21] : memref<208xf32, #tpu.memory_space<smem>>
    %c22 = arith.constant 22 : index
    %22 = memref.load %arg1[%c22] : memref<208xf32, #tpu.memory_space<smem>>
    %c23 = arith.constant 23 : index
    %23 = memref.load %arg1[%c23] : memref<208xf32, #tpu.memory_space<smem>>
    %c24 = arith.constant 24 : index
    %24 = memref.load %arg1[%c24] : memref<208xf32, #tpu.memory_space<smem>>
    %c25 = arith.constant 25 : index
    %25 = memref.load %arg1[%c25] : memref<208xf32, #tpu.memory_space<smem>>
    %c26 = arith.constant 26 : index
    %26 = memref.load %arg1[%c26] : memref<208xf32, #tpu.memory_space<smem>>
    %c27 = arith.constant 27 : index
    %27 = memref.load %arg1[%c27] : memref<208xf32, #tpu.memory_space<smem>>
    %c28 = arith.constant 28 : index
    %28 = memref.load %arg1[%c28] : memref<208xf32, #tpu.memory_space<smem>>
    %c29 = arith.constant 29 : index
    %29 = memref.load %arg1[%c29] : memref<208xf32, #tpu.memory_space<smem>>
    %c30 = arith.constant 30 : index
    %30 = memref.load %arg1[%c30] : memref<208xf32, #tpu.memory_space<smem>>
    %c31 = arith.constant 31 : index
    %31 = memref.load %arg1[%c31] : memref<208xf32, #tpu.memory_space<smem>>
    %c32 = arith.constant 32 : index
    %32 = memref.load %arg1[%c32] : memref<208xf32, #tpu.memory_space<smem>>
    %c33 = arith.constant 33 : index
    %33 = memref.load %arg1[%c33] : memref<208xf32, #tpu.memory_space<smem>>
    %c34 = arith.constant 34 : index
    %34 = memref.load %arg1[%c34] : memref<208xf32, #tpu.memory_space<smem>>
    %c35 = arith.constant 35 : index
    %35 = memref.load %arg1[%c35] : memref<208xf32, #tpu.memory_space<smem>>
    %c36 = arith.constant 36 : index
    %36 = memref.load %arg1[%c36] : memref<208xf32, #tpu.memory_space<smem>>
    %c37 = arith.constant 37 : index
    %37 = memref.load %arg1[%c37] : memref<208xf32, #tpu.memory_space<smem>>
    %c38 = arith.constant 38 : index
    %38 = memref.load %arg1[%c38] : memref<208xf32, #tpu.memory_space<smem>>
    %c39 = arith.constant 39 : index
    %39 = memref.load %arg1[%c39] : memref<208xf32, #tpu.memory_space<smem>>
    %c40 = arith.constant 40 : index
    %40 = memref.load %arg1[%c40] : memref<208xf32, #tpu.memory_space<smem>>
    %c41 = arith.constant 41 : index
    %41 = memref.load %arg1[%c41] : memref<208xf32, #tpu.memory_space<smem>>
    %c42 = arith.constant 42 : index
    %42 = memref.load %arg1[%c42] : memref<208xf32, #tpu.memory_space<smem>>
    %c43 = arith.constant 43 : index
    %43 = memref.load %arg1[%c43] : memref<208xf32, #tpu.memory_space<smem>>
    %c44 = arith.constant 44 : index
    %44 = memref.load %arg1[%c44] : memref<208xf32, #tpu.memory_space<smem>>
    %c45 = arith.constant 45 : index
    %45 = memref.load %arg1[%c45] : memref<208xf32, #tpu.memory_space<smem>>
    %c46 = arith.constant 46 : index
    %46 = memref.load %arg1[%c46] : memref<208xf32, #tpu.memory_space<smem>>
    %c47 = arith.constant 47 : index
    %47 = memref.load %arg1[%c47] : memref<208xf32, #tpu.memory_space<smem>>
    %c48 = arith.constant 48 : index
    %48 = memref.load %arg1[%c48] : memref<208xf32, #tpu.memory_space<smem>>
    %c49 = arith.constant 49 : index
    %49 = memref.load %arg1[%c49] : memref<208xf32, #tpu.memory_space<smem>>
    %c50 = arith.constant 50 : index
    %50 = memref.load %arg1[%c50] : memref<208xf32, #tpu.memory_space<smem>>
    %c51 = arith.constant 51 : index
    %51 = memref.load %arg1[%c51] : memref<208xf32, #tpu.memory_space<smem>>
    %c52 = arith.constant 52 : index
    %52 = memref.load %arg1[%c52] : memref<208xf32, #tpu.memory_space<smem>>
    %c53 = arith.constant 53 : index
    %53 = memref.load %arg1[%c53] : memref<208xf32, #tpu.memory_space<smem>>
    %c54 = arith.constant 54 : index
    %54 = memref.load %arg1[%c54] : memref<208xf32, #tpu.memory_space<smem>>
    %c55 = arith.constant 55 : index
    %55 = memref.load %arg1[%c55] : memref<208xf32, #tpu.memory_space<smem>>
    %c56 = arith.constant 56 : index
    %56 = memref.load %arg1[%c56] : memref<208xf32, #tpu.memory_space<smem>>
    %c57 = arith.constant 57 : index
    %57 = memref.load %arg1[%c57] : memref<208xf32, #tpu.memory_space<smem>>
    %c58 = arith.constant 58 : index
    %58 = memref.load %arg1[%c58] : memref<208xf32, #tpu.memory_space<smem>>
    %c59 = arith.constant 59 : index
    %59 = memref.load %arg1[%c59] : memref<208xf32, #tpu.memory_space<smem>>
    %c60 = arith.constant 60 : index
    %60 = memref.load %arg1[%c60] : memref<208xf32, #tpu.memory_space<smem>>
    %c61 = arith.constant 61 : index
    %61 = memref.load %arg1[%c61] : memref<208xf32, #tpu.memory_space<smem>>
    %c62 = arith.constant 62 : index
    %62 = memref.load %arg1[%c62] : memref<208xf32, #tpu.memory_space<smem>>
    %c63 = arith.constant 63 : index
    %63 = memref.load %arg1[%c63] : memref<208xf32, #tpu.memory_space<smem>>
    %c64 = arith.constant 64 : index
    %64 = memref.load %arg1[%c64] : memref<208xf32, #tpu.memory_space<smem>>
    %c65 = arith.constant 65 : index
    %65 = memref.load %arg1[%c65] : memref<208xf32, #tpu.memory_space<smem>>
    %c66 = arith.constant 66 : index
    %66 = memref.load %arg1[%c66] : memref<208xf32, #tpu.memory_space<smem>>
    %c67 = arith.constant 67 : index
    %67 = memref.load %arg1[%c67] : memref<208xf32, #tpu.memory_space<smem>>
    %c68 = arith.constant 68 : index
    %68 = memref.load %arg1[%c68] : memref<208xf32, #tpu.memory_space<smem>>
    %c69 = arith.constant 69 : index
    %69 = memref.load %arg1[%c69] : memref<208xf32, #tpu.memory_space<smem>>
    %c70 = arith.constant 70 : index
    %70 = memref.load %arg1[%c70] : memref<208xf32, #tpu.memory_space<smem>>
    %c71 = arith.constant 71 : index
    %71 = memref.load %arg1[%c71] : memref<208xf32, #tpu.memory_space<smem>>
    %c72 = arith.constant 72 : index
    %72 = memref.load %arg1[%c72] : memref<208xf32, #tpu.memory_space<smem>>
    %c73 = arith.constant 73 : index
    %73 = memref.load %arg1[%c73] : memref<208xf32, #tpu.memory_space<smem>>
    %c74 = arith.constant 74 : index
    %74 = memref.load %arg1[%c74] : memref<208xf32, #tpu.memory_space<smem>>
    %c75 = arith.constant 75 : index
    %75 = memref.load %arg1[%c75] : memref<208xf32, #tpu.memory_space<smem>>
    %c76 = arith.constant 76 : index
    %76 = memref.load %arg1[%c76] : memref<208xf32, #tpu.memory_space<smem>>
    %c77 = arith.constant 77 : index
    %77 = memref.load %arg1[%c77] : memref<208xf32, #tpu.memory_space<smem>>
    %c78 = arith.constant 78 : index
    %78 = memref.load %arg1[%c78] : memref<208xf32, #tpu.memory_space<smem>>
    %c79 = arith.constant 79 : index
    %79 = memref.load %arg1[%c79] : memref<208xf32, #tpu.memory_space<smem>>
    %c80 = arith.constant 80 : index
    %80 = memref.load %arg1[%c80] : memref<208xf32, #tpu.memory_space<smem>>
    %c81 = arith.constant 81 : index
    %81 = memref.load %arg1[%c81] : memref<208xf32, #tpu.memory_space<smem>>
    %c82 = arith.constant 82 : index
    %82 = memref.load %arg1[%c82] : memref<208xf32, #tpu.memory_space<smem>>
    %c83 = arith.constant 83 : index
    %83 = memref.load %arg1[%c83] : memref<208xf32, #tpu.memory_space<smem>>
    %c84 = arith.constant 84 : index
    %84 = memref.load %arg1[%c84] : memref<208xf32, #tpu.memory_space<smem>>
    %c85 = arith.constant 85 : index
    %85 = memref.load %arg1[%c85] : memref<208xf32, #tpu.memory_space<smem>>
    %c86 = arith.constant 86 : index
    %86 = memref.load %arg1[%c86] : memref<208xf32, #tpu.memory_space<smem>>
    %c87 = arith.constant 87 : index
    %87 = memref.load %arg1[%c87] : memref<208xf32, #tpu.memory_space<smem>>
    %c88 = arith.constant 88 : index
    %88 = memref.load %arg1[%c88] : memref<208xf32, #tpu.memory_space<smem>>
    %c89 = arith.constant 89 : index
    %89 = memref.load %arg1[%c89] : memref<208xf32, #tpu.memory_space<smem>>
    %c90 = arith.constant 90 : index
    %90 = memref.load %arg1[%c90] : memref<208xf32, #tpu.memory_space<smem>>
    %c91 = arith.constant 91 : index
    %91 = memref.load %arg1[%c91] : memref<208xf32, #tpu.memory_space<smem>>
    %c92 = arith.constant 92 : index
    %92 = memref.load %arg1[%c92] : memref<208xf32, #tpu.memory_space<smem>>
    %c93 = arith.constant 93 : index
    %93 = memref.load %arg1[%c93] : memref<208xf32, #tpu.memory_space<smem>>
    %c94 = arith.constant 94 : index
    %94 = memref.load %arg1[%c94] : memref<208xf32, #tpu.memory_space<smem>>
    %c95 = arith.constant 95 : index
    %95 = memref.load %arg1[%c95] : memref<208xf32, #tpu.memory_space<smem>>
    %c96 = arith.constant 96 : index
    %96 = memref.load %arg1[%c96] : memref<208xf32, #tpu.memory_space<smem>>
    %c97 = arith.constant 97 : index
    %97 = memref.load %arg1[%c97] : memref<208xf32, #tpu.memory_space<smem>>
    %c98 = arith.constant 98 : index
    %98 = memref.load %arg1[%c98] : memref<208xf32, #tpu.memory_space<smem>>
    %c99 = arith.constant 99 : index
    %99 = memref.load %arg1[%c99] : memref<208xf32, #tpu.memory_space<smem>>
    %c100 = arith.constant 100 : index
    %100 = memref.load %arg1[%c100] : memref<208xf32, #tpu.memory_space<smem>>
    %c101 = arith.constant 101 : index
    %101 = memref.load %arg1[%c101] : memref<208xf32, #tpu.memory_space<smem>>
    %c102 = arith.constant 102 : index
    %102 = memref.load %arg1[%c102] : memref<208xf32, #tpu.memory_space<smem>>
    %c103 = arith.constant 103 : index
    %103 = memref.load %arg1[%c103] : memref<208xf32, #tpu.memory_space<smem>>
    %c104 = arith.constant 104 : index
    %104 = memref.load %arg1[%c104] : memref<208xf32, #tpu.memory_space<smem>>
    %c105 = arith.constant 105 : index
    %105 = memref.load %arg1[%c105] : memref<208xf32, #tpu.memory_space<smem>>
    %c106 = arith.constant 106 : index
    %106 = memref.load %arg1[%c106] : memref<208xf32, #tpu.memory_space<smem>>
    %c107 = arith.constant 107 : index
    %107 = memref.load %arg1[%c107] : memref<208xf32, #tpu.memory_space<smem>>
    %c108 = arith.constant 108 : index
    %108 = memref.load %arg1[%c108] : memref<208xf32, #tpu.memory_space<smem>>
    %c109 = arith.constant 109 : index
    %109 = memref.load %arg1[%c109] : memref<208xf32, #tpu.memory_space<smem>>
    %c110 = arith.constant 110 : index
    %110 = memref.load %arg1[%c110] : memref<208xf32, #tpu.memory_space<smem>>
    %c111 = arith.constant 111 : index
    %111 = memref.load %arg1[%c111] : memref<208xf32, #tpu.memory_space<smem>>
    %c112 = arith.constant 112 : index
    %112 = memref.load %arg1[%c112] : memref<208xf32, #tpu.memory_space<smem>>
    %c113 = arith.constant 113 : index
    %113 = memref.load %arg1[%c113] : memref<208xf32, #tpu.memory_space<smem>>
    %c114 = arith.constant 114 : index
    %114 = memref.load %arg1[%c114] : memref<208xf32, #tpu.memory_space<smem>>
    %c115 = arith.constant 115 : index
    %115 = memref.load %arg1[%c115] : memref<208xf32, #tpu.memory_space<smem>>
    %c116 = arith.constant 116 : index
    %116 = memref.load %arg1[%c116] : memref<208xf32, #tpu.memory_space<smem>>
    %c117 = arith.constant 117 : index
    %117 = memref.load %arg1[%c117] : memref<208xf32, #tpu.memory_space<smem>>
    %c118 = arith.constant 118 : index
    %118 = memref.load %arg1[%c118] : memref<208xf32, #tpu.memory_space<smem>>
    %c119 = arith.constant 119 : index
    %119 = memref.load %arg1[%c119] : memref<208xf32, #tpu.memory_space<smem>>
    %c120 = arith.constant 120 : index
    %120 = memref.load %arg1[%c120] : memref<208xf32, #tpu.memory_space<smem>>
    %c121 = arith.constant 121 : index
    %121 = memref.load %arg1[%c121] : memref<208xf32, #tpu.memory_space<smem>>
    %c122 = arith.constant 122 : index
    %122 = memref.load %arg1[%c122] : memref<208xf32, #tpu.memory_space<smem>>
    %c123 = arith.constant 123 : index
    %123 = memref.load %arg1[%c123] : memref<208xf32, #tpu.memory_space<smem>>
    %c124 = arith.constant 124 : index
    %124 = memref.load %arg1[%c124] : memref<208xf32, #tpu.memory_space<smem>>
    %c125 = arith.constant 125 : index
    %125 = memref.load %arg1[%c125] : memref<208xf32, #tpu.memory_space<smem>>
    %c126 = arith.constant 126 : index
    %126 = memref.load %arg1[%c126] : memref<208xf32, #tpu.memory_space<smem>>
    %c127 = arith.constant 127 : index
    %127 = memref.load %arg1[%c127] : memref<208xf32, #tpu.memory_space<smem>>
    %c128 = arith.constant 128 : index
    %128 = memref.load %arg1[%c128] : memref<208xf32, #tpu.memory_space<smem>>
    %c129 = arith.constant 129 : index
    %129 = memref.load %arg1[%c129] : memref<208xf32, #tpu.memory_space<smem>>
    %c130 = arith.constant 130 : index
    %130 = memref.load %arg1[%c130] : memref<208xf32, #tpu.memory_space<smem>>
    %c131 = arith.constant 131 : index
    %131 = memref.load %arg1[%c131] : memref<208xf32, #tpu.memory_space<smem>>
    %c132 = arith.constant 132 : index
    %132 = memref.load %arg1[%c132] : memref<208xf32, #tpu.memory_space<smem>>
    %c133 = arith.constant 133 : index
    %133 = memref.load %arg1[%c133] : memref<208xf32, #tpu.memory_space<smem>>
    %c134 = arith.constant 134 : index
    %134 = memref.load %arg1[%c134] : memref<208xf32, #tpu.memory_space<smem>>
    %c135 = arith.constant 135 : index
    %135 = memref.load %arg1[%c135] : memref<208xf32, #tpu.memory_space<smem>>
    %c136 = arith.constant 136 : index
    %136 = memref.load %arg1[%c136] : memref<208xf32, #tpu.memory_space<smem>>
    %c137 = arith.constant 137 : index
    %137 = memref.load %arg1[%c137] : memref<208xf32, #tpu.memory_space<smem>>
    %c138 = arith.constant 138 : index
    %138 = memref.load %arg1[%c138] : memref<208xf32, #tpu.memory_space<smem>>
    %c139 = arith.constant 139 : index
    %139 = memref.load %arg1[%c139] : memref<208xf32, #tpu.memory_space<smem>>
    %c140 = arith.constant 140 : index
    %140 = memref.load %arg1[%c140] : memref<208xf32, #tpu.memory_space<smem>>
    %c141 = arith.constant 141 : index
    %141 = memref.load %arg1[%c141] : memref<208xf32, #tpu.memory_space<smem>>
    %c142 = arith.constant 142 : index
    %142 = memref.load %arg1[%c142] : memref<208xf32, #tpu.memory_space<smem>>
    %c143 = arith.constant 143 : index
    %143 = memref.load %arg1[%c143] : memref<208xf32, #tpu.memory_space<smem>>
    %c144 = arith.constant 144 : index
    %144 = memref.load %arg1[%c144] : memref<208xf32, #tpu.memory_space<smem>>
    %c145 = arith.constant 145 : index
    %145 = memref.load %arg1[%c145] : memref<208xf32, #tpu.memory_space<smem>>
    %c146 = arith.constant 146 : index
    %146 = memref.load %arg1[%c146] : memref<208xf32, #tpu.memory_space<smem>>
    %c147 = arith.constant 147 : index
    %147 = memref.load %arg1[%c147] : memref<208xf32, #tpu.memory_space<smem>>
    %c148 = arith.constant 148 : index
    %148 = memref.load %arg1[%c148] : memref<208xf32, #tpu.memory_space<smem>>
    %c149 = arith.constant 149 : index
    %149 = memref.load %arg1[%c149] : memref<208xf32, #tpu.memory_space<smem>>
    %c150 = arith.constant 150 : index
    %150 = memref.load %arg1[%c150] : memref<208xf32, #tpu.memory_space<smem>>
    %c151 = arith.constant 151 : index
    %151 = memref.load %arg1[%c151] : memref<208xf32, #tpu.memory_space<smem>>
    %c152 = arith.constant 152 : index
    %152 = memref.load %arg1[%c152] : memref<208xf32, #tpu.memory_space<smem>>
    %c153 = arith.constant 153 : index
    %153 = memref.load %arg1[%c153] : memref<208xf32, #tpu.memory_space<smem>>
    %c154 = arith.constant 154 : index
    %154 = memref.load %arg1[%c154] : memref<208xf32, #tpu.memory_space<smem>>
    %c155 = arith.constant 155 : index
    %155 = memref.load %arg1[%c155] : memref<208xf32, #tpu.memory_space<smem>>
    %c156 = arith.constant 156 : index
    %156 = memref.load %arg1[%c156] : memref<208xf32, #tpu.memory_space<smem>>
    %c157 = arith.constant 157 : index
    %157 = memref.load %arg1[%c157] : memref<208xf32, #tpu.memory_space<smem>>
    %c158 = arith.constant 158 : index
    %158 = memref.load %arg1[%c158] : memref<208xf32, #tpu.memory_space<smem>>
    %c159 = arith.constant 159 : index
    %159 = memref.load %arg1[%c159] : memref<208xf32, #tpu.memory_space<smem>>
    %c160 = arith.constant 160 : index
    %160 = memref.load %arg1[%c160] : memref<208xf32, #tpu.memory_space<smem>>
    %c161 = arith.constant 161 : index
    %161 = memref.load %arg1[%c161] : memref<208xf32, #tpu.memory_space<smem>>
    %c162 = arith.constant 162 : index
    %162 = memref.load %arg1[%c162] : memref<208xf32, #tpu.memory_space<smem>>
    %c163 = arith.constant 163 : index
    %163 = memref.load %arg1[%c163] : memref<208xf32, #tpu.memory_space<smem>>
    %c164 = arith.constant 164 : index
    %164 = memref.load %arg1[%c164] : memref<208xf32, #tpu.memory_space<smem>>
    %c165 = arith.constant 165 : index
    %165 = memref.load %arg1[%c165] : memref<208xf32, #tpu.memory_space<smem>>
    %c166 = arith.constant 166 : index
    %166 = memref.load %arg1[%c166] : memref<208xf32, #tpu.memory_space<smem>>
    %c167 = arith.constant 167 : index
    %167 = memref.load %arg1[%c167] : memref<208xf32, #tpu.memory_space<smem>>
    %c168 = arith.constant 168 : index
    %168 = memref.load %arg1[%c168] : memref<208xf32, #tpu.memory_space<smem>>
    %c169 = arith.constant 169 : index
    %169 = memref.load %arg1[%c169] : memref<208xf32, #tpu.memory_space<smem>>
    %c170 = arith.constant 170 : index
    %170 = memref.load %arg1[%c170] : memref<208xf32, #tpu.memory_space<smem>>
    %c171 = arith.constant 171 : index
    %171 = memref.load %arg1[%c171] : memref<208xf32, #tpu.memory_space<smem>>
    %c172 = arith.constant 172 : index
    %172 = memref.load %arg1[%c172] : memref<208xf32, #tpu.memory_space<smem>>
    %c173 = arith.constant 173 : index
    %173 = memref.load %arg1[%c173] : memref<208xf32, #tpu.memory_space<smem>>
    %c174 = arith.constant 174 : index
    %174 = memref.load %arg1[%c174] : memref<208xf32, #tpu.memory_space<smem>>
    %c175 = arith.constant 175 : index
    %175 = memref.load %arg1[%c175] : memref<208xf32, #tpu.memory_space<smem>>
    %c176 = arith.constant 176 : index
    %176 = memref.load %arg1[%c176] : memref<208xf32, #tpu.memory_space<smem>>
    %c177 = arith.constant 177 : index
    %177 = memref.load %arg1[%c177] : memref<208xf32, #tpu.memory_space<smem>>
    %c178 = arith.constant 178 : index
    %178 = memref.load %arg1[%c178] : memref<208xf32, #tpu.memory_space<smem>>
    %c179 = arith.constant 179 : index
    %179 = memref.load %arg1[%c179] : memref<208xf32, #tpu.memory_space<smem>>
    %c180 = arith.constant 180 : index
    %180 = memref.load %arg1[%c180] : memref<208xf32, #tpu.memory_space<smem>>
    %c181 = arith.constant 181 : index
    %181 = memref.load %arg1[%c181] : memref<208xf32, #tpu.memory_space<smem>>
    %c182 = arith.constant 182 : index
    %182 = memref.load %arg1[%c182] : memref<208xf32, #tpu.memory_space<smem>>
    %c183 = arith.constant 183 : index
    %183 = memref.load %arg1[%c183] : memref<208xf32, #tpu.memory_space<smem>>
    %c184 = arith.constant 184 : index
    %184 = memref.load %arg1[%c184] : memref<208xf32, #tpu.memory_space<smem>>
    %c185 = arith.constant 185 : index
    %185 = memref.load %arg1[%c185] : memref<208xf32, #tpu.memory_space<smem>>
    %c186 = arith.constant 186 : index
    %186 = memref.load %arg1[%c186] : memref<208xf32, #tpu.memory_space<smem>>
    %c187 = arith.constant 187 : index
    %187 = memref.load %arg1[%c187] : memref<208xf32, #tpu.memory_space<smem>>
    %c188 = arith.constant 188 : index
    %188 = memref.load %arg1[%c188] : memref<208xf32, #tpu.memory_space<smem>>
    %c189 = arith.constant 189 : index
    %189 = memref.load %arg1[%c189] : memref<208xf32, #tpu.memory_space<smem>>
    %c190 = arith.constant 190 : index
    %190 = memref.load %arg1[%c190] : memref<208xf32, #tpu.memory_space<smem>>
    %c191 = arith.constant 191 : index
    %191 = memref.load %arg1[%c191] : memref<208xf32, #tpu.memory_space<smem>>
    %c192 = arith.constant 192 : index
    %192 = memref.load %arg1[%c192] : memref<208xf32, #tpu.memory_space<smem>>
    %c193 = arith.constant 193 : index
    %193 = memref.load %arg1[%c193] : memref<208xf32, #tpu.memory_space<smem>>
    %c194 = arith.constant 194 : index
    %194 = memref.load %arg1[%c194] : memref<208xf32, #tpu.memory_space<smem>>
    %c195 = arith.constant 195 : index
    %195 = memref.load %arg1[%c195] : memref<208xf32, #tpu.memory_space<smem>>
    %c196 = arith.constant 196 : index
    %196 = memref.load %arg1[%c196] : memref<208xf32, #tpu.memory_space<smem>>
    %c197 = arith.constant 197 : index
    %197 = memref.load %arg1[%c197] : memref<208xf32, #tpu.memory_space<smem>>
    %c198 = arith.constant 198 : index
    %198 = memref.load %arg1[%c198] : memref<208xf32, #tpu.memory_space<smem>>
    %c199 = arith.constant 199 : index
    %199 = memref.load %arg1[%c199] : memref<208xf32, #tpu.memory_space<smem>>
    %c200 = arith.constant 200 : index
    %200 = memref.load %arg1[%c200] : memref<208xf32, #tpu.memory_space<smem>>
    %c201 = arith.constant 201 : index
    %201 = memref.load %arg1[%c201] : memref<208xf32, #tpu.memory_space<smem>>
    %c202 = arith.constant 202 : index
    %202 = memref.load %arg1[%c202] : memref<208xf32, #tpu.memory_space<smem>>
    %c203 = arith.constant 203 : index
    %203 = memref.load %arg1[%c203] : memref<208xf32, #tpu.memory_space<smem>>
    %c204 = arith.constant 204 : index
    %204 = memref.load %arg1[%c204] : memref<208xf32, #tpu.memory_space<smem>>
    %c205 = arith.constant 205 : index
    %205 = memref.load %arg1[%c205] : memref<208xf32, #tpu.memory_space<smem>>
    %c206 = arith.constant 206 : index
    %206 = memref.load %arg1[%c206] : memref<208xf32, #tpu.memory_space<smem>>
    %c207 = arith.constant 207 : index
    %207 = memref.load %arg1[%c207] : memref<208xf32, #tpu.memory_space<smem>>
    %c0_i32 = arith.constant 0 : i32
    %c8_i32 = arith.constant 8 : i32
    %208 = arith.muli %c0_i32, %c8_i32 : i32
    %209 = tpu.assume_multiple %208, 8 : i32
    %210 = arith.index_cast %209 : i32 to index
    %c0_0 = arith.constant 0 : index
    %211 = vector.load %arg2[%210, %c0_0] : memref<8x128xf32, #tpu.memory_space<vmem>>, vector<8x128xf32>
    %212 = vector.broadcast %0 : f32 to vector<8x128xf32>
    %213 = arith.mulf %212, %211 : vector<8x128xf32>
    %214 = vector.broadcast %9 : f32 to vector<8x128xf32>
    %215 = arith.addf %213, %214 : vector<8x128xf32>
    %216 = math.tanh %215 : vector<8x128xf32>
    %217 = vector.broadcast %1 : f32 to vector<8x128xf32>
    %218 = arith.mulf %217, %211 : vector<8x128xf32>
    %219 = vector.broadcast %10 : f32 to vector<8x128xf32>
    %220 = arith.addf %218, %219 : vector<8x128xf32>
    %221 = math.tanh %220 : vector<8x128xf32>
    %222 = vector.broadcast %2 : f32 to vector<8x128xf32>
    %223 = arith.mulf %222, %211 : vector<8x128xf32>
    %224 = vector.broadcast %11 : f32 to vector<8x128xf32>
    %225 = arith.addf %223, %224 : vector<8x128xf32>
    %226 = math.tanh %225 : vector<8x128xf32>
    %227 = vector.broadcast %3 : f32 to vector<8x128xf32>
    %228 = arith.mulf %227, %211 : vector<8x128xf32>
    %229 = vector.broadcast %12 : f32 to vector<8x128xf32>
    %230 = arith.addf %228, %229 : vector<8x128xf32>
    %231 = math.tanh %230 : vector<8x128xf32>
    %232 = vector.broadcast %4 : f32 to vector<8x128xf32>
    %233 = arith.mulf %232, %211 : vector<8x128xf32>
    %234 = vector.broadcast %13 : f32 to vector<8x128xf32>
    %235 = arith.addf %233, %234 : vector<8x128xf32>
    %236 = math.tanh %235 : vector<8x128xf32>
    %237 = vector.broadcast %5 : f32 to vector<8x128xf32>
    %238 = arith.mulf %237, %211 : vector<8x128xf32>
    %239 = vector.broadcast %14 : f32 to vector<8x128xf32>
    %240 = arith.addf %238, %239 : vector<8x128xf32>
    %241 = math.tanh %240 : vector<8x128xf32>
    %242 = vector.broadcast %6 : f32 to vector<8x128xf32>
    %243 = arith.mulf %242, %211 : vector<8x128xf32>
    %244 = vector.broadcast %15 : f32 to vector<8x128xf32>
    %245 = arith.addf %243, %244 : vector<8x128xf32>
    %246 = math.tanh %245 : vector<8x128xf32>
    %247 = vector.broadcast %7 : f32 to vector<8x128xf32>
    %248 = arith.mulf %247, %211 : vector<8x128xf32>
    %249 = vector.broadcast %16 : f32 to vector<8x128xf32>
    %250 = arith.addf %248, %249 : vector<8x128xf32>
    %251 = math.tanh %250 : vector<8x128xf32>
    %252 = vector.broadcast %8 : f32 to vector<8x128xf32>
    %253 = arith.mulf %252, %211 : vector<8x128xf32>
    %254 = vector.broadcast %17 : f32 to vector<8x128xf32>
    %255 = arith.addf %253, %254 : vector<8x128xf32>
    %256 = math.tanh %255 : vector<8x128xf32>
    %257 = vector.broadcast %18 : f32 to vector<8x128xf32>
    %258 = arith.mulf %257, %216 : vector<8x128xf32>
    %259 = vector.broadcast %19 : f32 to vector<8x128xf32>
    %260 = arith.mulf %259, %221 : vector<8x128xf32>
    %261 = arith.addf %258, %260 : vector<8x128xf32>
    %262 = vector.broadcast %20 : f32 to vector<8x128xf32>
    %263 = arith.mulf %262, %226 : vector<8x128xf32>
    %264 = arith.addf %261, %263 : vector<8x128xf32>
    %265 = vector.broadcast %21 : f32 to vector<8x128xf32>
    %266 = arith.mulf %265, %231 : vector<8x128xf32>
    %267 = arith.addf %264, %266 : vector<8x128xf32>
    %268 = vector.broadcast %22 : f32 to vector<8x128xf32>
    %269 = arith.mulf %268, %236 : vector<8x128xf32>
    %270 = arith.addf %267, %269 : vector<8x128xf32>
    %271 = vector.broadcast %23 : f32 to vector<8x128xf32>
    %272 = arith.mulf %271, %241 : vector<8x128xf32>
    %273 = arith.addf %270, %272 : vector<8x128xf32>
    %274 = vector.broadcast %24 : f32 to vector<8x128xf32>
    %275 = arith.mulf %274, %246 : vector<8x128xf32>
    %276 = arith.addf %273, %275 : vector<8x128xf32>
    %277 = vector.broadcast %25 : f32 to vector<8x128xf32>
    %278 = arith.mulf %277, %251 : vector<8x128xf32>
    %279 = arith.addf %276, %278 : vector<8x128xf32>
    %280 = vector.broadcast %26 : f32 to vector<8x128xf32>
    %281 = arith.mulf %280, %256 : vector<8x128xf32>
    %282 = arith.addf %279, %281 : vector<8x128xf32>
    %283 = vector.broadcast %99 : f32 to vector<8x128xf32>
    %284 = arith.addf %282, %283 : vector<8x128xf32>
    %285 = math.tanh %284 : vector<8x128xf32>
    %286 = vector.broadcast %27 : f32 to vector<8x128xf32>
    %287 = arith.mulf %286, %216 : vector<8x128xf32>
    %288 = vector.broadcast %28 : f32 to vector<8x128xf32>
    %289 = arith.mulf %288, %221 : vector<8x128xf32>
    %290 = arith.addf %287, %289 : vector<8x128xf32>
    %291 = vector.broadcast %29 : f32 to vector<8x128xf32>
    %292 = arith.mulf %291, %226 : vector<8x128xf32>
    %293 = arith.addf %290, %292 : vector<8x128xf32>
    %294 = vector.broadcast %30 : f32 to vector<8x128xf32>
    %295 = arith.mulf %294, %231 : vector<8x128xf32>
    %296 = arith.addf %293, %295 : vector<8x128xf32>
    %297 = vector.broadcast %31 : f32 to vector<8x128xf32>
    %298 = arith.mulf %297, %236 : vector<8x128xf32>
    %299 = arith.addf %296, %298 : vector<8x128xf32>
    %300 = vector.broadcast %32 : f32 to vector<8x128xf32>
    %301 = arith.mulf %300, %241 : vector<8x128xf32>
    %302 = arith.addf %299, %301 : vector<8x128xf32>
    %303 = vector.broadcast %33 : f32 to vector<8x128xf32>
    %304 = arith.mulf %303, %246 : vector<8x128xf32>
    %305 = arith.addf %302, %304 : vector<8x128xf32>
    %306 = vector.broadcast %34 : f32 to vector<8x128xf32>
    %307 = arith.mulf %306, %251 : vector<8x128xf32>
    %308 = arith.addf %305, %307 : vector<8x128xf32>
    %309 = vector.broadcast %35 : f32 to vector<8x128xf32>
    %310 = arith.mulf %309, %256 : vector<8x128xf32>
    %311 = arith.addf %308, %310 : vector<8x128xf32>
    %312 = vector.broadcast %100 : f32 to vector<8x128xf32>
    %313 = arith.addf %311, %312 : vector<8x128xf32>
    %314 = math.tanh %313 : vector<8x128xf32>
    %315 = vector.broadcast %36 : f32 to vector<8x128xf32>
    %316 = arith.mulf %315, %216 : vector<8x128xf32>
    %317 = vector.broadcast %37 : f32 to vector<8x128xf32>
    %318 = arith.mulf %317, %221 : vector<8x128xf32>
    %319 = arith.addf %316, %318 : vector<8x128xf32>
    %320 = vector.broadcast %38 : f32 to vector<8x128xf32>
    %321 = arith.mulf %320, %226 : vector<8x128xf32>
    %322 = arith.addf %319, %321 : vector<8x128xf32>
    %323 = vector.broadcast %39 : f32 to vector<8x128xf32>
    %324 = arith.mulf %323, %231 : vector<8x128xf32>
    %325 = arith.addf %322, %324 : vector<8x128xf32>
    %326 = vector.broadcast %40 : f32 to vector<8x128xf32>
    %327 = arith.mulf %326, %236 : vector<8x128xf32>
    %328 = arith.addf %325, %327 : vector<8x128xf32>
    %329 = vector.broadcast %41 : f32 to vector<8x128xf32>
    %330 = arith.mulf %329, %241 : vector<8x128xf32>
    %331 = arith.addf %328, %330 : vector<8x128xf32>
    %332 = vector.broadcast %42 : f32 to vector<8x128xf32>
    %333 = arith.mulf %332, %246 : vector<8x128xf32>
    %334 = arith.addf %331, %333 : vector<8x128xf32>
    %335 = vector.broadcast %43 : f32 to vector<8x128xf32>
    %336 = arith.mulf %335, %251 : vector<8x128xf32>
    %337 = arith.addf %334, %336 : vector<8x128xf32>
    %338 = vector.broadcast %44 : f32 to vector<8x128xf32>
    %339 = arith.mulf %338, %256 : vector<8x128xf32>
    %340 = arith.addf %337, %339 : vector<8x128xf32>
    %341 = vector.broadcast %101 : f32 to vector<8x128xf32>
    %342 = arith.addf %340, %341 : vector<8x128xf32>
    %343 = math.tanh %342 : vector<8x128xf32>
    %344 = vector.broadcast %45 : f32 to vector<8x128xf32>
    %345 = arith.mulf %344, %216 : vector<8x128xf32>
    %346 = vector.broadcast %46 : f32 to vector<8x128xf32>
    %347 = arith.mulf %346, %221 : vector<8x128xf32>
    %348 = arith.addf %345, %347 : vector<8x128xf32>
    %349 = vector.broadcast %47 : f32 to vector<8x128xf32>
    %350 = arith.mulf %349, %226 : vector<8x128xf32>
    %351 = arith.addf %348, %350 : vector<8x128xf32>
    %352 = vector.broadcast %48 : f32 to vector<8x128xf32>
    %353 = arith.mulf %352, %231 : vector<8x128xf32>
    %354 = arith.addf %351, %353 : vector<8x128xf32>
    %355 = vector.broadcast %49 : f32 to vector<8x128xf32>
    %356 = arith.mulf %355, %236 : vector<8x128xf32>
    %357 = arith.addf %354, %356 : vector<8x128xf32>
    %358 = vector.broadcast %50 : f32 to vector<8x128xf32>
    %359 = arith.mulf %358, %241 : vector<8x128xf32>
    %360 = arith.addf %357, %359 : vector<8x128xf32>
    %361 = vector.broadcast %51 : f32 to vector<8x128xf32>
    %362 = arith.mulf %361, %246 : vector<8x128xf32>
    %363 = arith.addf %360, %362 : vector<8x128xf32>
    %364 = vector.broadcast %52 : f32 to vector<8x128xf32>
    %365 = arith.mulf %364, %251 : vector<8x128xf32>
    %366 = arith.addf %363, %365 : vector<8x128xf32>
    %367 = vector.broadcast %53 : f32 to vector<8x128xf32>
    %368 = arith.mulf %367, %256 : vector<8x128xf32>
    %369 = arith.addf %366, %368 : vector<8x128xf32>
    %370 = vector.broadcast %102 : f32 to vector<8x128xf32>
    %371 = arith.addf %369, %370 : vector<8x128xf32>
    %372 = math.tanh %371 : vector<8x128xf32>
    %373 = vector.broadcast %54 : f32 to vector<8x128xf32>
    %374 = arith.mulf %373, %216 : vector<8x128xf32>
    %375 = vector.broadcast %55 : f32 to vector<8x128xf32>
    %376 = arith.mulf %375, %221 : vector<8x128xf32>
    %377 = arith.addf %374, %376 : vector<8x128xf32>
    %378 = vector.broadcast %56 : f32 to vector<8x128xf32>
    %379 = arith.mulf %378, %226 : vector<8x128xf32>
    %380 = arith.addf %377, %379 : vector<8x128xf32>
    %381 = vector.broadcast %57 : f32 to vector<8x128xf32>
    %382 = arith.mulf %381, %231 : vector<8x128xf32>
    %383 = arith.addf %380, %382 : vector<8x128xf32>
    %384 = vector.broadcast %58 : f32 to vector<8x128xf32>
    %385 = arith.mulf %384, %236 : vector<8x128xf32>
    %386 = arith.addf %383, %385 : vector<8x128xf32>
    %387 = vector.broadcast %59 : f32 to vector<8x128xf32>
    %388 = arith.mulf %387, %241 : vector<8x128xf32>
    %389 = arith.addf %386, %388 : vector<8x128xf32>
    %390 = vector.broadcast %60 : f32 to vector<8x128xf32>
    %391 = arith.mulf %390, %246 : vector<8x128xf32>
    %392 = arith.addf %389, %391 : vector<8x128xf32>
    %393 = vector.broadcast %61 : f32 to vector<8x128xf32>
    %394 = arith.mulf %393, %251 : vector<8x128xf32>
    %395 = arith.addf %392, %394 : vector<8x128xf32>
    %396 = vector.broadcast %62 : f32 to vector<8x128xf32>
    %397 = arith.mulf %396, %256 : vector<8x128xf32>
    %398 = arith.addf %395, %397 : vector<8x128xf32>
    %399 = vector.broadcast %103 : f32 to vector<8x128xf32>
    %400 = arith.addf %398, %399 : vector<8x128xf32>
    %401 = math.tanh %400 : vector<8x128xf32>
    %402 = vector.broadcast %63 : f32 to vector<8x128xf32>
    %403 = arith.mulf %402, %216 : vector<8x128xf32>
    %404 = vector.broadcast %64 : f32 to vector<8x128xf32>
    %405 = arith.mulf %404, %221 : vector<8x128xf32>
    %406 = arith.addf %403, %405 : vector<8x128xf32>
    %407 = vector.broadcast %65 : f32 to vector<8x128xf32>
    %408 = arith.mulf %407, %226 : vector<8x128xf32>
    %409 = arith.addf %406, %408 : vector<8x128xf32>
    %410 = vector.broadcast %66 : f32 to vector<8x128xf32>
    %411 = arith.mulf %410, %231 : vector<8x128xf32>
    %412 = arith.addf %409, %411 : vector<8x128xf32>
    %413 = vector.broadcast %67 : f32 to vector<8x128xf32>
    %414 = arith.mulf %413, %236 : vector<8x128xf32>
    %415 = arith.addf %412, %414 : vector<8x128xf32>
    %416 = vector.broadcast %68 : f32 to vector<8x128xf32>
    %417 = arith.mulf %416, %241 : vector<8x128xf32>
    %418 = arith.addf %415, %417 : vector<8x128xf32>
    %419 = vector.broadcast %69 : f32 to vector<8x128xf32>
    %420 = arith.mulf %419, %246 : vector<8x128xf32>
    %421 = arith.addf %418, %420 : vector<8x128xf32>
    %422 = vector.broadcast %70 : f32 to vector<8x128xf32>
    %423 = arith.mulf %422, %251 : vector<8x128xf32>
    %424 = arith.addf %421, %423 : vector<8x128xf32>
    %425 = vector.broadcast %71 : f32 to vector<8x128xf32>
    %426 = arith.mulf %425, %256 : vector<8x128xf32>
    %427 = arith.addf %424, %426 : vector<8x128xf32>
    %428 = vector.broadcast %104 : f32 to vector<8x128xf32>
    %429 = arith.addf %427, %428 : vector<8x128xf32>
    %430 = math.tanh %429 : vector<8x128xf32>
    %431 = vector.broadcast %72 : f32 to vector<8x128xf32>
    %432 = arith.mulf %431, %216 : vector<8x128xf32>
    %433 = vector.broadcast %73 : f32 to vector<8x128xf32>
    %434 = arith.mulf %433, %221 : vector<8x128xf32>
    %435 = arith.addf %432, %434 : vector<8x128xf32>
    %436 = vector.broadcast %74 : f32 to vector<8x128xf32>
    %437 = arith.mulf %436, %226 : vector<8x128xf32>
    %438 = arith.addf %435, %437 : vector<8x128xf32>
    %439 = vector.broadcast %75 : f32 to vector<8x128xf32>
    %440 = arith.mulf %439, %231 : vector<8x128xf32>
    %441 = arith.addf %438, %440 : vector<8x128xf32>
    %442 = vector.broadcast %76 : f32 to vector<8x128xf32>
    %443 = arith.mulf %442, %236 : vector<8x128xf32>
    %444 = arith.addf %441, %443 : vector<8x128xf32>
    %445 = vector.broadcast %77 : f32 to vector<8x128xf32>
    %446 = arith.mulf %445, %241 : vector<8x128xf32>
    %447 = arith.addf %444, %446 : vector<8x128xf32>
    %448 = vector.broadcast %78 : f32 to vector<8x128xf32>
    %449 = arith.mulf %448, %246 : vector<8x128xf32>
    %450 = arith.addf %447, %449 : vector<8x128xf32>
    %451 = vector.broadcast %79 : f32 to vector<8x128xf32>
    %452 = arith.mulf %451, %251 : vector<8x128xf32>
    %453 = arith.addf %450, %452 : vector<8x128xf32>
    %454 = vector.broadcast %80 : f32 to vector<8x128xf32>
    %455 = arith.mulf %454, %256 : vector<8x128xf32>
    %456 = arith.addf %453, %455 : vector<8x128xf32>
    %457 = vector.broadcast %105 : f32 to vector<8x128xf32>
    %458 = arith.addf %456, %457 : vector<8x128xf32>
    %459 = math.tanh %458 : vector<8x128xf32>
    %460 = vector.broadcast %81 : f32 to vector<8x128xf32>
    %461 = arith.mulf %460, %216 : vector<8x128xf32>
    %462 = vector.broadcast %82 : f32 to vector<8x128xf32>
    %463 = arith.mulf %462, %221 : vector<8x128xf32>
    %464 = arith.addf %461, %463 : vector<8x128xf32>
    %465 = vector.broadcast %83 : f32 to vector<8x128xf32>
    %466 = arith.mulf %465, %226 : vector<8x128xf32>
    %467 = arith.addf %464, %466 : vector<8x128xf32>
    %468 = vector.broadcast %84 : f32 to vector<8x128xf32>
    %469 = arith.mulf %468, %231 : vector<8x128xf32>
    %470 = arith.addf %467, %469 : vector<8x128xf32>
    %471 = vector.broadcast %85 : f32 to vector<8x128xf32>
    %472 = arith.mulf %471, %236 : vector<8x128xf32>
    %473 = arith.addf %470, %472 : vector<8x128xf32>
    %474 = vector.broadcast %86 : f32 to vector<8x128xf32>
    %475 = arith.mulf %474, %241 : vector<8x128xf32>
    %476 = arith.addf %473, %475 : vector<8x128xf32>
    %477 = vector.broadcast %87 : f32 to vector<8x128xf32>
    %478 = arith.mulf %477, %246 : vector<8x128xf32>
    %479 = arith.addf %476, %478 : vector<8x128xf32>
    %480 = vector.broadcast %88 : f32 to vector<8x128xf32>
    %481 = arith.mulf %480, %251 : vector<8x128xf32>
    %482 = arith.addf %479, %481 : vector<8x128xf32>
    %483 = vector.broadcast %89 : f32 to vector<8x128xf32>
    %484 = arith.mulf %483, %256 : vector<8x128xf32>
    %485 = arith.addf %482, %484 : vector<8x128xf32>
    %486 = vector.broadcast %106 : f32 to vector<8x128xf32>
    %487 = arith.addf %485, %486 : vector<8x128xf32>
    %488 = math.tanh %487 : vector<8x128xf32>
    %489 = vector.broadcast %90 : f32 to vector<8x128xf32>
    %490 = arith.mulf %489, %216 : vector<8x128xf32>
    %491 = vector.broadcast %91 : f32 to vector<8x128xf32>
    %492 = arith.mulf %491, %221 : vector<8x128xf32>
    %493 = arith.addf %490, %492 : vector<8x128xf32>
    %494 = vector.broadcast %92 : f32 to vector<8x128xf32>
    %495 = arith.mulf %494, %226 : vector<8x128xf32>
    %496 = arith.addf %493, %495 : vector<8x128xf32>
    %497 = vector.broadcast %93 : f32 to vector<8x128xf32>
    %498 = arith.mulf %497, %231 : vector<8x128xf32>
    %499 = arith.addf %496, %498 : vector<8x128xf32>
    %500 = vector.broadcast %94 : f32 to vector<8x128xf32>
    %501 = arith.mulf %500, %236 : vector<8x128xf32>
    %502 = arith.addf %499, %501 : vector<8x128xf32>
    %503 = vector.broadcast %95 : f32 to vector<8x128xf32>
    %504 = arith.mulf %503, %241 : vector<8x128xf32>
    %505 = arith.addf %502, %504 : vector<8x128xf32>
    %506 = vector.broadcast %96 : f32 to vector<8x128xf32>
    %507 = arith.mulf %506, %246 : vector<8x128xf32>
    %508 = arith.addf %505, %507 : vector<8x128xf32>
    %509 = vector.broadcast %97 : f32 to vector<8x128xf32>
    %510 = arith.mulf %509, %251 : vector<8x128xf32>
    %511 = arith.addf %508, %510 : vector<8x128xf32>
    %512 = vector.broadcast %98 : f32 to vector<8x128xf32>
    %513 = arith.mulf %512, %256 : vector<8x128xf32>
    %514 = arith.addf %511, %513 : vector<8x128xf32>
    %515 = vector.broadcast %107 : f32 to vector<8x128xf32>
    %516 = arith.addf %514, %515 : vector<8x128xf32>
    %517 = math.tanh %516 : vector<8x128xf32>
    %518 = vector.broadcast %108 : f32 to vector<8x128xf32>
    %519 = arith.mulf %518, %285 : vector<8x128xf32>
    %520 = vector.broadcast %109 : f32 to vector<8x128xf32>
    %521 = arith.mulf %520, %314 : vector<8x128xf32>
    %522 = arith.addf %519, %521 : vector<8x128xf32>
    %523 = vector.broadcast %110 : f32 to vector<8x128xf32>
    %524 = arith.mulf %523, %343 : vector<8x128xf32>
    %525 = arith.addf %522, %524 : vector<8x128xf32>
    %526 = vector.broadcast %111 : f32 to vector<8x128xf32>
    %527 = arith.mulf %526, %372 : vector<8x128xf32>
    %528 = arith.addf %525, %527 : vector<8x128xf32>
    %529 = vector.broadcast %112 : f32 to vector<8x128xf32>
    %530 = arith.mulf %529, %401 : vector<8x128xf32>
    %531 = arith.addf %528, %530 : vector<8x128xf32>
    %532 = vector.broadcast %113 : f32 to vector<8x128xf32>
    %533 = arith.mulf %532, %430 : vector<8x128xf32>
    %534 = arith.addf %531, %533 : vector<8x128xf32>
    %535 = vector.broadcast %114 : f32 to vector<8x128xf32>
    %536 = arith.mulf %535, %459 : vector<8x128xf32>
    %537 = arith.addf %534, %536 : vector<8x128xf32>
    %538 = vector.broadcast %115 : f32 to vector<8x128xf32>
    %539 = arith.mulf %538, %488 : vector<8x128xf32>
    %540 = arith.addf %537, %539 : vector<8x128xf32>
    %541 = vector.broadcast %116 : f32 to vector<8x128xf32>
    %542 = arith.mulf %541, %517 : vector<8x128xf32>
    %543 = arith.addf %540, %542 : vector<8x128xf32>
    %544 = vector.broadcast %189 : f32 to vector<8x128xf32>
    %545 = arith.addf %543, %544 : vector<8x128xf32>
    %546 = math.tanh %545 : vector<8x128xf32>
    %547 = vector.broadcast %117 : f32 to vector<8x128xf32>
    %548 = arith.mulf %547, %285 : vector<8x128xf32>
    %549 = vector.broadcast %118 : f32 to vector<8x128xf32>
    %550 = arith.mulf %549, %314 : vector<8x128xf32>
    %551 = arith.addf %548, %550 : vector<8x128xf32>
    %552 = vector.broadcast %119 : f32 to vector<8x128xf32>
    %553 = arith.mulf %552, %343 : vector<8x128xf32>
    %554 = arith.addf %551, %553 : vector<8x128xf32>
    %555 = vector.broadcast %120 : f32 to vector<8x128xf32>
    %556 = arith.mulf %555, %372 : vector<8x128xf32>
    %557 = arith.addf %554, %556 : vector<8x128xf32>
    %558 = vector.broadcast %121 : f32 to vector<8x128xf32>
    %559 = arith.mulf %558, %401 : vector<8x128xf32>
    %560 = arith.addf %557, %559 : vector<8x128xf32>
    %561 = vector.broadcast %122 : f32 to vector<8x128xf32>
    %562 = arith.mulf %561, %430 : vector<8x128xf32>
    %563 = arith.addf %560, %562 : vector<8x128xf32>
    %564 = vector.broadcast %123 : f32 to vector<8x128xf32>
    %565 = arith.mulf %564, %459 : vector<8x128xf32>
    %566 = arith.addf %563, %565 : vector<8x128xf32>
    %567 = vector.broadcast %124 : f32 to vector<8x128xf32>
    %568 = arith.mulf %567, %488 : vector<8x128xf32>
    %569 = arith.addf %566, %568 : vector<8x128xf32>
    %570 = vector.broadcast %125 : f32 to vector<8x128xf32>
    %571 = arith.mulf %570, %517 : vector<8x128xf32>
    %572 = arith.addf %569, %571 : vector<8x128xf32>
    %573 = vector.broadcast %190 : f32 to vector<8x128xf32>
    %574 = arith.addf %572, %573 : vector<8x128xf32>
    %575 = math.tanh %574 : vector<8x128xf32>
    %576 = vector.broadcast %126 : f32 to vector<8x128xf32>
    %577 = arith.mulf %576, %285 : vector<8x128xf32>
    %578 = vector.broadcast %127 : f32 to vector<8x128xf32>
    %579 = arith.mulf %578, %314 : vector<8x128xf32>
    %580 = arith.addf %577, %579 : vector<8x128xf32>
    %581 = vector.broadcast %128 : f32 to vector<8x128xf32>
    %582 = arith.mulf %581, %343 : vector<8x128xf32>
    %583 = arith.addf %580, %582 : vector<8x128xf32>
    %584 = vector.broadcast %129 : f32 to vector<8x128xf32>
    %585 = arith.mulf %584, %372 : vector<8x128xf32>
    %586 = arith.addf %583, %585 : vector<8x128xf32>
    %587 = vector.broadcast %130 : f32 to vector<8x128xf32>
    %588 = arith.mulf %587, %401 : vector<8x128xf32>
    %589 = arith.addf %586, %588 : vector<8x128xf32>
    %590 = vector.broadcast %131 : f32 to vector<8x128xf32>
    %591 = arith.mulf %590, %430 : vector<8x128xf32>
    %592 = arith.addf %589, %591 : vector<8x128xf32>
    %593 = vector.broadcast %132 : f32 to vector<8x128xf32>
    %594 = arith.mulf %593, %459 : vector<8x128xf32>
    %595 = arith.addf %592, %594 : vector<8x128xf32>
    %596 = vector.broadcast %133 : f32 to vector<8x128xf32>
    %597 = arith.mulf %596, %488 : vector<8x128xf32>
    %598 = arith.addf %595, %597 : vector<8x128xf32>
    %599 = vector.broadcast %134 : f32 to vector<8x128xf32>
    %600 = arith.mulf %599, %517 : vector<8x128xf32>
    %601 = arith.addf %598, %600 : vector<8x128xf32>
    %602 = vector.broadcast %191 : f32 to vector<8x128xf32>
    %603 = arith.addf %601, %602 : vector<8x128xf32>
    %604 = math.tanh %603 : vector<8x128xf32>
    %605 = vector.broadcast %135 : f32 to vector<8x128xf32>
    %606 = arith.mulf %605, %285 : vector<8x128xf32>
    %607 = vector.broadcast %136 : f32 to vector<8x128xf32>
    %608 = arith.mulf %607, %314 : vector<8x128xf32>
    %609 = arith.addf %606, %608 : vector<8x128xf32>
    %610 = vector.broadcast %137 : f32 to vector<8x128xf32>
    %611 = arith.mulf %610, %343 : vector<8x128xf32>
    %612 = arith.addf %609, %611 : vector<8x128xf32>
    %613 = vector.broadcast %138 : f32 to vector<8x128xf32>
    %614 = arith.mulf %613, %372 : vector<8x128xf32>
    %615 = arith.addf %612, %614 : vector<8x128xf32>
    %616 = vector.broadcast %139 : f32 to vector<8x128xf32>
    %617 = arith.mulf %616, %401 : vector<8x128xf32>
    %618 = arith.addf %615, %617 : vector<8x128xf32>
    %619 = vector.broadcast %140 : f32 to vector<8x128xf32>
    %620 = arith.mulf %619, %430 : vector<8x128xf32>
    %621 = arith.addf %618, %620 : vector<8x128xf32>
    %622 = vector.broadcast %141 : f32 to vector<8x128xf32>
    %623 = arith.mulf %622, %459 : vector<8x128xf32>
    %624 = arith.addf %621, %623 : vector<8x128xf32>
    %625 = vector.broadcast %142 : f32 to vector<8x128xf32>
    %626 = arith.mulf %625, %488 : vector<8x128xf32>
    %627 = arith.addf %624, %626 : vector<8x128xf32>
    %628 = vector.broadcast %143 : f32 to vector<8x128xf32>
    %629 = arith.mulf %628, %517 : vector<8x128xf32>
    %630 = arith.addf %627, %629 : vector<8x128xf32>
    %631 = vector.broadcast %192 : f32 to vector<8x128xf32>
    %632 = arith.addf %630, %631 : vector<8x128xf32>
    %633 = math.tanh %632 : vector<8x128xf32>
    %634 = vector.broadcast %144 : f32 to vector<8x128xf32>
    %635 = arith.mulf %634, %285 : vector<8x128xf32>
    %636 = vector.broadcast %145 : f32 to vector<8x128xf32>
    %637 = arith.mulf %636, %314 : vector<8x128xf32>
    %638 = arith.addf %635, %637 : vector<8x128xf32>
    %639 = vector.broadcast %146 : f32 to vector<8x128xf32>
    %640 = arith.mulf %639, %343 : vector<8x128xf32>
    %641 = arith.addf %638, %640 : vector<8x128xf32>
    %642 = vector.broadcast %147 : f32 to vector<8x128xf32>
    %643 = arith.mulf %642, %372 : vector<8x128xf32>
    %644 = arith.addf %641, %643 : vector<8x128xf32>
    %645 = vector.broadcast %148 : f32 to vector<8x128xf32>
    %646 = arith.mulf %645, %401 : vector<8x128xf32>
    %647 = arith.addf %644, %646 : vector<8x128xf32>
    %648 = vector.broadcast %149 : f32 to vector<8x128xf32>
    %649 = arith.mulf %648, %430 : vector<8x128xf32>
    %650 = arith.addf %647, %649 : vector<8x128xf32>
    %651 = vector.broadcast %150 : f32 to vector<8x128xf32>
    %652 = arith.mulf %651, %459 : vector<8x128xf32>
    %653 = arith.addf %650, %652 : vector<8x128xf32>
    %654 = vector.broadcast %151 : f32 to vector<8x128xf32>
    %655 = arith.mulf %654, %488 : vector<8x128xf32>
    %656 = arith.addf %653, %655 : vector<8x128xf32>
    %657 = vector.broadcast %152 : f32 to vector<8x128xf32>
    %658 = arith.mulf %657, %517 : vector<8x128xf32>
    %659 = arith.addf %656, %658 : vector<8x128xf32>
    %660 = vector.broadcast %193 : f32 to vector<8x128xf32>
    %661 = arith.addf %659, %660 : vector<8x128xf32>
    %662 = math.tanh %661 : vector<8x128xf32>
    %663 = vector.broadcast %153 : f32 to vector<8x128xf32>
    %664 = arith.mulf %663, %285 : vector<8x128xf32>
    %665 = vector.broadcast %154 : f32 to vector<8x128xf32>
    %666 = arith.mulf %665, %314 : vector<8x128xf32>
    %667 = arith.addf %664, %666 : vector<8x128xf32>
    %668 = vector.broadcast %155 : f32 to vector<8x128xf32>
    %669 = arith.mulf %668, %343 : vector<8x128xf32>
    %670 = arith.addf %667, %669 : vector<8x128xf32>
    %671 = vector.broadcast %156 : f32 to vector<8x128xf32>
    %672 = arith.mulf %671, %372 : vector<8x128xf32>
    %673 = arith.addf %670, %672 : vector<8x128xf32>
    %674 = vector.broadcast %157 : f32 to vector<8x128xf32>
    %675 = arith.mulf %674, %401 : vector<8x128xf32>
    %676 = arith.addf %673, %675 : vector<8x128xf32>
    %677 = vector.broadcast %158 : f32 to vector<8x128xf32>
    %678 = arith.mulf %677, %430 : vector<8x128xf32>
    %679 = arith.addf %676, %678 : vector<8x128xf32>
    %680 = vector.broadcast %159 : f32 to vector<8x128xf32>
    %681 = arith.mulf %680, %459 : vector<8x128xf32>
    %682 = arith.addf %679, %681 : vector<8x128xf32>
    %683 = vector.broadcast %160 : f32 to vector<8x128xf32>
    %684 = arith.mulf %683, %488 : vector<8x128xf32>
    %685 = arith.addf %682, %684 : vector<8x128xf32>
    %686 = vector.broadcast %161 : f32 to vector<8x128xf32>
    %687 = arith.mulf %686, %517 : vector<8x128xf32>
    %688 = arith.addf %685, %687 : vector<8x128xf32>
    %689 = vector.broadcast %194 : f32 to vector<8x128xf32>
    %690 = arith.addf %688, %689 : vector<8x128xf32>
    %691 = math.tanh %690 : vector<8x128xf32>
    %692 = vector.broadcast %162 : f32 to vector<8x128xf32>
    %693 = arith.mulf %692, %285 : vector<8x128xf32>
    %694 = vector.broadcast %163 : f32 to vector<8x128xf32>
    %695 = arith.mulf %694, %314 : vector<8x128xf32>
    %696 = arith.addf %693, %695 : vector<8x128xf32>
    %697 = vector.broadcast %164 : f32 to vector<8x128xf32>
    %698 = arith.mulf %697, %343 : vector<8x128xf32>
    %699 = arith.addf %696, %698 : vector<8x128xf32>
    %700 = vector.broadcast %165 : f32 to vector<8x128xf32>
    %701 = arith.mulf %700, %372 : vector<8x128xf32>
    %702 = arith.addf %699, %701 : vector<8x128xf32>
    %703 = vector.broadcast %166 : f32 to vector<8x128xf32>
    %704 = arith.mulf %703, %401 : vector<8x128xf32>
    %705 = arith.addf %702, %704 : vector<8x128xf32>
    %706 = vector.broadcast %167 : f32 to vector<8x128xf32>
    %707 = arith.mulf %706, %430 : vector<8x128xf32>
    %708 = arith.addf %705, %707 : vector<8x128xf32>
    %709 = vector.broadcast %168 : f32 to vector<8x128xf32>
    %710 = arith.mulf %709, %459 : vector<8x128xf32>
    %711 = arith.addf %708, %710 : vector<8x128xf32>
    %712 = vector.broadcast %169 : f32 to vector<8x128xf32>
    %713 = arith.mulf %712, %488 : vector<8x128xf32>
    %714 = arith.addf %711, %713 : vector<8x128xf32>
    %715 = vector.broadcast %170 : f32 to vector<8x128xf32>
    %716 = arith.mulf %715, %517 : vector<8x128xf32>
    %717 = arith.addf %714, %716 : vector<8x128xf32>
    %718 = vector.broadcast %195 : f32 to vector<8x128xf32>
    %719 = arith.addf %717, %718 : vector<8x128xf32>
    %720 = math.tanh %719 : vector<8x128xf32>
    %721 = vector.broadcast %171 : f32 to vector<8x128xf32>
    %722 = arith.mulf %721, %285 : vector<8x128xf32>
    %723 = vector.broadcast %172 : f32 to vector<8x128xf32>
    %724 = arith.mulf %723, %314 : vector<8x128xf32>
    %725 = arith.addf %722, %724 : vector<8x128xf32>
    %726 = vector.broadcast %173 : f32 to vector<8x128xf32>
    %727 = arith.mulf %726, %343 : vector<8x128xf32>
    %728 = arith.addf %725, %727 : vector<8x128xf32>
    %729 = vector.broadcast %174 : f32 to vector<8x128xf32>
    %730 = arith.mulf %729, %372 : vector<8x128xf32>
    %731 = arith.addf %728, %730 : vector<8x128xf32>
    %732 = vector.broadcast %175 : f32 to vector<8x128xf32>
    %733 = arith.mulf %732, %401 : vector<8x128xf32>
    %734 = arith.addf %731, %733 : vector<8x128xf32>
    %735 = vector.broadcast %176 : f32 to vector<8x128xf32>
    %736 = arith.mulf %735, %430 : vector<8x128xf32>
    %737 = arith.addf %734, %736 : vector<8x128xf32>
    %738 = vector.broadcast %177 : f32 to vector<8x128xf32>
    %739 = arith.mulf %738, %459 : vector<8x128xf32>
    %740 = arith.addf %737, %739 : vector<8x128xf32>
    %741 = vector.broadcast %178 : f32 to vector<8x128xf32>
    %742 = arith.mulf %741, %488 : vector<8x128xf32>
    %743 = arith.addf %740, %742 : vector<8x128xf32>
    %744 = vector.broadcast %179 : f32 to vector<8x128xf32>
    %745 = arith.mulf %744, %517 : vector<8x128xf32>
    %746 = arith.addf %743, %745 : vector<8x128xf32>
    %747 = vector.broadcast %196 : f32 to vector<8x128xf32>
    %748 = arith.addf %746, %747 : vector<8x128xf32>
    %749 = math.tanh %748 : vector<8x128xf32>
    %750 = vector.broadcast %180 : f32 to vector<8x128xf32>
    %751 = arith.mulf %750, %285 : vector<8x128xf32>
    %752 = vector.broadcast %181 : f32 to vector<8x128xf32>
    %753 = arith.mulf %752, %314 : vector<8x128xf32>
    %754 = arith.addf %751, %753 : vector<8x128xf32>
    %755 = vector.broadcast %182 : f32 to vector<8x128xf32>
    %756 = arith.mulf %755, %343 : vector<8x128xf32>
    %757 = arith.addf %754, %756 : vector<8x128xf32>
    %758 = vector.broadcast %183 : f32 to vector<8x128xf32>
    %759 = arith.mulf %758, %372 : vector<8x128xf32>
    %760 = arith.addf %757, %759 : vector<8x128xf32>
    %761 = vector.broadcast %184 : f32 to vector<8x128xf32>
    %762 = arith.mulf %761, %401 : vector<8x128xf32>
    %763 = arith.addf %760, %762 : vector<8x128xf32>
    %764 = vector.broadcast %185 : f32 to vector<8x128xf32>
    %765 = arith.mulf %764, %430 : vector<8x128xf32>
    %766 = arith.addf %763, %765 : vector<8x128xf32>
    %767 = vector.broadcast %186 : f32 to vector<8x128xf32>
    %768 = arith.mulf %767, %459 : vector<8x128xf32>
    %769 = arith.addf %766, %768 : vector<8x128xf32>
    %770 = vector.broadcast %187 : f32 to vector<8x128xf32>
    %771 = arith.mulf %770, %488 : vector<8x128xf32>
    %772 = arith.addf %769, %771 : vector<8x128xf32>
    %773 = vector.broadcast %188 : f32 to vector<8x128xf32>
    %774 = arith.mulf %773, %517 : vector<8x128xf32>
    %775 = arith.addf %772, %774 : vector<8x128xf32>
    %776 = vector.broadcast %197 : f32 to vector<8x128xf32>
    %777 = arith.addf %775, %776 : vector<8x128xf32>
    %778 = math.tanh %777 : vector<8x128xf32>
    %779 = vector.broadcast %198 : f32 to vector<8x128xf32>
    %780 = arith.mulf %779, %546 : vector<8x128xf32>
    %781 = vector.broadcast %199 : f32 to vector<8x128xf32>
    %782 = arith.mulf %781, %575 : vector<8x128xf32>
    %783 = arith.addf %780, %782 : vector<8x128xf32>
    %784 = vector.broadcast %200 : f32 to vector<8x128xf32>
    %785 = arith.mulf %784, %604 : vector<8x128xf32>
    %786 = arith.addf %783, %785 : vector<8x128xf32>
    %787 = vector.broadcast %201 : f32 to vector<8x128xf32>
    %788 = arith.mulf %787, %633 : vector<8x128xf32>
    %789 = arith.addf %786, %788 : vector<8x128xf32>
    %790 = vector.broadcast %202 : f32 to vector<8x128xf32>
    %791 = arith.mulf %790, %662 : vector<8x128xf32>
    %792 = arith.addf %789, %791 : vector<8x128xf32>
    %793 = vector.broadcast %203 : f32 to vector<8x128xf32>
    %794 = arith.mulf %793, %691 : vector<8x128xf32>
    %795 = arith.addf %792, %794 : vector<8x128xf32>
    %796 = vector.broadcast %204 : f32 to vector<8x128xf32>
    %797 = arith.mulf %796, %720 : vector<8x128xf32>
    %798 = arith.addf %795, %797 : vector<8x128xf32>
    %799 = vector.broadcast %205 : f32 to vector<8x128xf32>
    %800 = arith.mulf %799, %749 : vector<8x128xf32>
    %801 = arith.addf %798, %800 : vector<8x128xf32>
    %802 = vector.broadcast %206 : f32 to vector<8x128xf32>
    %803 = arith.mulf %802, %778 : vector<8x128xf32>
    %804 = arith.addf %801, %803 : vector<8x128xf32>
    %805 = vector.broadcast %207 : f32 to vector<8x128xf32>
    %806 = arith.addf %804, %805 : vector<8x128xf32>
    %807 = arith.index_cast %209 : i32 to index
    %c0_1 = arith.constant 0 : index
    %808 = vector.load %arg3[%807, %c0_1] : memref<8x128xf32, #tpu.memory_space<vmem>>, vector<8x128xf32>
    tpu.vector_store %arg3[%807, %c0_1], %806 {strides = array<i32>} : memref<8x128xf32, #tpu.memory_space<vmem>>, vector<8x128xf32>,
    %c1_i32 = arith.constant 1 : i32
    return
  }
  func.func @transform_0(%arg0: i32, %arg1: memref<208xf32, #tpu.memory_space<smem>>) -> (i32, i32) {
    %c0_i32 = arith.constant 0 : i32
    %c0_i32_0 = arith.constant 0 : i32
    return %arg0, %c0_i32 : i32, i32
  }
  func.func @transform_1(%arg0: i32, %arg1: memref<208xf32, #tpu.memory_space<smem>>) -> (i32, i32) {
    %c0_i32 = arith.constant 0 : i32
    %c0_i32_0 = arith.constant 0 : i32
    return %arg0, %c0_i32 : i32, i32
  }
}

</mosaic_0001>

<llo_original>
// kernel: tpu_custom_call.1
$region0: #{tpu_custom_call.1}
  #allocation0 [shape = 'u32[]', space=smem, size = 0x4, offset = 0x4, fixed_abs, tag = 'smem constant byte address 0x4 - core index']
  #allocation1 [shape = 'u32[144,128]{1,0:T(1,128)}', space=vmem, size = 0x12000, scoped, tag = 'internal scratch']
  #allocation2 [shape = 's32[1]{0}', space=sflag, size = 0x4, scoped, tag = 'scoped memory for tpu_custom_call.1']
  #allocation3 [shape = 'u8[1024]{0}', space=smem, size = 0x400, scoped, tag = 'prefetched SMEM operand 0']
  %s0 = inlined_call_operand.hbm [shape: f32[208], index: 0, kind: input, shape index: {}]
  %s1 = inlined_call_operand.hbm [shape: f32[8,128], index: 1, kind: input, shape index: {}]
  %s2 = inlined_call_operand.hbm [shape: f32[8,128], index: 2, kind: output, shape index: {}]
  %s3 = sld [smem:[#allocation0]]
  $region18: #{tpu_custom_call.1} parent=0
    _
  %s5 = ssub.s32 1, %s3
  %s6 = scalar_select 0, %s5, %s3
  %8 = dma.hbm_to_smem %s0, 32, [#allocation3], [#allocation2]
  %9 = dma.done [#allocation2], 32
  %10 = sfence
  $region1: #{tpu_custom_call.1} parent=0
    #allocation4 [shape = 'u8[4096]{0}', space=vmem, size = 0x1000, scoped, tag = 'input window, operand 1, single buffered']
    #allocation5 [shape = 's32[1]{0}', space=sflag, size = 0x4, scoped, tag = 'scoped memory for tpu_custom_call.1']
    #allocation6 [shape = 's32[1]{0}', space=sflag, size = 0x4, scoped, tag = 'scoped memory for tpu_custom_call.1']
    #allocation7 [shape = 'u8[4096]{0}', space=vmem, size = 0x1000, scoped, tag = 'output window, operand 0, single buffered']
    %11 = vsyncpa [#allocation5], 0
    %12 = vsyncpa [#allocation6], 0
    // Predicated region
    $region2: #{tpu_custom_call.1} parent=1 // pred_check
      _
    $region3: #{tpu_custom_call.1} parent=1 // pred_check_branch
      %14 = sbr.rel (0) target = $region5
    $region4: #{tpu_custom_call.1} parent=1 // pred_region
      %s16 = ssub.s32 128, 128
      %17 = vsyncadd [#allocation5], %s16
      %s19 = sshll.u32 [#allocation4], 4
      %s20 = int_to_ptr.vmem [resolvable:$true] %s19
      %22 = dma.hbm_to_vmem [thread:$0]  %s1, 128, %s20, [#allocation5]
    $region5: #{tpu_custom_call.1} parent=1 // pred_fallthru
      _
    // Predicated region
    $region6: #{tpu_custom_call.1} parent=1 // pred_check
      _
    $region7: #{tpu_custom_call.1} parent=1 // pred_check_branch
      %24 = sbr.rel (0) target = $region9
    $region8: #{tpu_custom_call.1} parent=1 // pred_region
      %25 = dma.done [#allocation5], 128
    $region9: #{tpu_custom_call.1} parent=1 // pred_fallthru
      _
    %s26 = sld [smem:[#allocation3]]
    %s27 = sld [smem:[#allocation3 + $0x1]]
    %s28 = sld [smem:[#allocation3 + $0x2]]
    %s29 = sld [smem:[#allocation3 + $0x3]]
    %s30 = sld [smem:[#allocation3 + $0x4]]
    %s31 = sld [smem:[#allocation3 + $0x5]]
    %s32 = sld [smem:[#allocation3 + $0x6]]
    %s33 = sld [smem:[#allocation3 + $0x7]]
    %s34 = sld [smem:[#allocation3 + $0x8]]
    %s35 = sld [smem:[#allocation3 + $0x9]]
    %s36 = sld [smem:[#allocation3 + $0xa]]
    %s37 = sld [smem:[#allocation3 + $0xb]]
    %s38 = sld [smem:[#allocation3 + $0xc]]
    %s39 = sld [smem:[#allocation3 + $0xd]]
    %s40 = sld [smem:[#allocation3 + $0xe]]
    %s41 = sld [smem:[#allocation3 + $0xf]]
    %s42 = sld [smem:[#allocation3 + $0x10]]
    %s43 = sld [smem:[#allocation3 + $0x11]]
    %s44 = sld [smem:[#allocation3 + $0x12]]
    %s45 = sld [smem:[#allocation3 + $0x13]]
    %s46 = sld [smem:[#allocation3 + $0x14]]
    %s47 = sld [smem:[#allocation3 + $0x15]]
    %s48 = sld [smem:[#allocation3 + $0x16]]
    %s49 = sld [smem:[#allocation3 + $0x17]]
    %s50 = sld [smem:[#allocation3 + $0x18]]
    %s51 = sld [smem:[#allocation3 + $0x19]]
    %s52 = sld [smem:[#allocation3 + $0x1a]]
    %s53 = sld [smem:[#allocation3 + $0x1b]]
    %s54 = sld [smem:[#allocation3 + $0x1c]]
    %s55 = sld [smem:[#allocation3 + $0x1d]]
    %s56 = sld [smem:[#allocation3 + $0x1e]]
    %s57 = sld [smem:[#allocation3 + $0x1f]]
    %s58 = sld [smem:[#allocation3 + $0x20]]
    %s59 = sld [smem:[#allocation3 + $0x21]]
    %s60 = sld [smem:[#allocation3 + $0x22]]
    %s61 = sld [smem:[#allocation3 + $0x23]]
    %s62 = sld [smem:[#allocation3 + $0x24]]
    %s63 = sld [smem:[#allocation3 + $0x25]]
    %s64 = sld [smem:[#allocation3 + $0x26]]
    %s65 = sld [smem:[#allocation3 + $0x27]]
    %s66 = sld [smem:[#allocation3 + $0x28]]
    %s67 = sld [smem:[#allocation3 + $0x29]]
    %s68 = sld [smem:[#allocation3 + $0x2a]]
    %s69 = sld [smem:[#allocation3 + $0x2b]]
    %s70 = sld [smem:[#allocation3 + $0x2c]]
    %s71 = sld [smem:[#allocation3 + $0x2d]]
    %s72 = sld [smem:[#allocation3 + $0x2e]]
    %s73 = sld [smem:[#allocation3 + $0x2f]]
    %s74 = sld [smem:[#allocation3 + $0x30]]
    %s75 = sld [smem:[#allocation3 + $0x31]]
    %s76 = sld [smem:[#allocation3 + $0x32]]
    %s77 = sld [smem:[#allocation3 + $0x33]]
    %s78 = sld [smem:[#allocation3 + $0x34]]
    %s79 = sld [smem:[#allocation3 + $0x35]]
    %s80 = sld [smem:[#allocation3 + $0x36]]
    %s81 = sld [smem:[#allocation3 + $0x37]]
    %s82 = sld [smem:[#allocation3 + $0x38]]
    %s83 = sld [smem:[#allocation3 + $0x39]]
    %s84 = sld [smem:[#allocation3 + $0x3a]]
    %s85 = sld [smem:[#allocation3 + $0x3b]]
    %s86 = sld [smem:[#allocation3 + $0x3c]]
    %s87 = sld [smem:[#allocation3 + $0x3d]]
    %s88 = sld [smem:[#allocation3 + $0x3e]]
    %s89 = sld [smem:[#allocation3 + $0x3f]]
    %s90 = sld [smem:[#allocation3 + $0x40]]
    %s91 = sld [smem:[#allocation3 + $0x41]]
    %s92 = sld [smem:[#allocation3 + $0x42]]
    %s93 = sld [smem:[#allocation3 + $0x43]]
    %s94 = sld [smem:[#allocation3 + $0x44]]
    %s95 = sld [smem:[#allocation3 + $0x45]]
    %s96 = sld [smem:[#allocation3 + $0x46]]
    %s97 = sld [smem:[#allocation3 + $0x47]]
    %s98 = sld [smem:[#allocation3 + $0x48]]
    %s99 = sld [smem:[#allocation3 + $0x49]]
    %s100 = sld [smem:[#allocation3 + $0x4a]]
    %s101 = sld [smem:[#allocation3 + $0x4b]]
    %s102 = sld [smem:[#allocation3 + $0x4c]]
    %s103 = sld [smem:[#allocation3 + $0x4d]]
    %s104 = sld [smem:[#allocation3 + $0x4e]]
    %s105 = sld [smem:[#allocation3 + $0x4f]]
    %s106 = sld [smem:[#allocation3 + $0x50]]
    %s107 = sld [smem:[#allocation3 + $0x51]]
    %s108 = sld [smem:[#allocation3 + $0x52]]
    %s109 = sld [smem:[#allocation3 + $0x53]]
    %s110 = sld [smem:[#allocation3 + $0x54]]
    %s111 = sld [smem:[#allocation3 + $0x55]]
    %s112 = sld [smem:[#allocation3 + $0x56]]
    %s113 = sld [smem:[#allocation3 + $0x57]]
    %s114 = sld [smem:[#allocation3 + $0x58]]
    %s115 = sld [smem:[#allocation3 + $0x59]]
    %s116 = sld [smem:[#allocation3 + $0x5a]]
    %s117 = sld [smem:[#allocation3 + $0x5b]]
    %s118 = sld [smem:[#allocation3 + $0x5c]]
    %s119 = sld [smem:[#allocation3 + $0x5d]]
    %s120 = sld [smem:[#allocation3 + $0x5e]]
    %s121 = sld [smem:[#allocation3 + $0x5f]]
    %s122 = sld [smem:[#allocation3 + $0x60]]
    %s123 = sld [smem:[#allocation3 + $0x61]]
    %s124 = sld [smem:[#allocation3 + $0x62]]
    %s125 = sld [smem:[#allocation3 + $0x63]]
    %s126 = sld [smem:[#allocation3 + $0x64]]
    %s127 = sld [smem:[#allocation3 + $0x65]]
    %s128 = sld [smem:[#allocation3 + $0x66]]
    %s129 = sld [smem:[#allocation3 + $0x67]]
    %s130 = sld [smem:[#allocation3 + $0x68]]
    %s131 = sld [smem:[#allocation3 + $0x69]]
    %s132 = sld [smem:[#allocation3 + $0x6a]]
    %s133 = sld [smem:[#allocation3 + $0x6b]]
    %s134 = sld [smem:[#allocation3 + $0x6c]]
    %s135 = sld [smem:[#allocation3 + $0x6d]]
    %s136 = sld [smem:[#allocation3 + $0x6e]]
    %s137 = sld [smem:[#allocation3 + $0x6f]]
    %s138 = sld [smem:[#allocation3 + $0x70]]
    %s139 = sld [smem:[#allocation3 + $0x71]]
    %s140 = sld [smem:[#allocation3 + $0x72]]
    %s141 = sld [smem:[#allocation3 + $0x73]]
    %s142 = sld [smem:[#allocation3 + $0x74]]
    %s143 = sld [smem:[#allocation3 + $0x75]]
    %s144 = sld [smem:[#allocation3 + $0x76]]
    %s145 = sld [smem:[#allocation3 + $0x77]]
    %s146 = sld [smem:[#allocation3 + $0x78]]
    %s147 = sld [smem:[#allocation3 + $0x79]]
    %s148 = sld [smem:[#allocation3 + $0x7a]]
    %s149 = sld [smem:[#allocation3 + $0x7b]]
    %s150 = sld [smem:[#allocation3 + $0x7c]]
    %s151 = sld [smem:[#allocation3 + $0x7d]]
    %s152 = sld [smem:[#allocation3 + $0x7e]]
    %s153 = sld [smem:[#allocation3 + $0x7f]]
    %s154 = sld [smem:[#allocation3 + $0x80]]
    %s155 = sld [smem:[#allocation3 + $0x81]]
    %s156 = sld [smem:[#allocation3 + $0x82]]
    %s157 = sld [smem:[#allocation3 + $0x83]]
    %s158 = sld [smem:[#allocation3 + $0x84]]
    %s159 = sld [smem:[#allocation3 + $0x85]]
    %s160 = sld [smem:[#allocation3 + $0x86]]
    %s161 = sld [smem:[#allocation3 + $0x87]]
    %s162 = sld [smem:[#allocation3 + $0x88]]
    %s163 = sld [smem:[#allocation3 + $0x89]]
    %s164 = sld [smem:[#allocation3 + $0x8a]]
    %s165 = sld [smem:[#allocation3 + $0x8b]]
    %s166 = sld [smem:[#allocation3 + $0x8c]]
    %s167 = sld [smem:[#allocation3 + $0x8d]]
    %s168 = sld [smem:[#allocation3 + $0x8e]]
    %s169 = sld [smem:[#allocation3 + $0x8f]]
    %s170 = sld [smem:[#allocation3 + $0x90]]
    %s171 = sld [smem:[#allocation3 + $0x91]]
    %s172 = sld [smem:[#allocation3 + $0x92]]
    %s173 = sld [smem:[#allocation3 + $0x93]]
    %s174 = sld [smem:[#allocation3 + $0x94]]
    %s175 = sld [smem:[#allocation3 + $0x95]]
    %s176 = sld [smem:[#allocation3 + $0x96]]
    %s177 = sld [smem:[#allocation3 + $0x97]]
    %s178 = sld [smem:[#allocation3 + $0x98]]
    %s179 = sld [smem:[#allocation3 + $0x99]]
    %s180 = sld [smem:[#allocation3 + $0x9a]]
    %s181 = sld [smem:[#allocation3 + $0x9b]]
    %s182 = sld [smem:[#allocation3 + $0x9c]]
    %s183 = sld [smem:[#allocation3 + $0x9d]]
    %s184 = sld [smem:[#allocation3 + $0x9e]]
    %s185 = sld [smem:[#allocation3 + $0x9f]]
    %s186 = sld [smem:[#allocation3 + $0xa0]]
    %s187 = sld [smem:[#allocation3 + $0xa1]]
    %s188 = sld [smem:[#allocation3 + $0xa2]]
    %s189 = sld [smem:[#allocation3 + $0xa3]]
    %s190 = sld [smem:[#allocation3 + $0xa4]]
    %s191 = sld [smem:[#allocation3 + $0xa5]]
    %s192 = sld [smem:[#allocation3 + $0xa6]]
    %s193 = sld [smem:[#allocation3 + $0xa7]]
    %s194 = sld [smem:[#allocation3 + $0xa8]]
    %s195 = sld [smem:[#allocation3 + $0xa9]]
    %s196 = sld [smem:[#allocation3 + $0xaa]]
    %s197 = sld [smem:[#allocation3 + $0xab]]
    %s198 = sld [smem:[#allocation3 + $0xac]]
    %s199 = sld [smem:[#allocation3 + $0xad]]
    %s200 = sld [smem:[#allocation3 + $0xae]]
    %s201 = sld [smem:[#allocation3 + $0xaf]]
    %s202 = sld [smem:[#allocation3 + $0xb0]]
    %s203 = sld [smem:[#allocation3 + $0xb1]]
    %s204 = sld [smem:[#allocation3 + $0xb2]]
    %s205 = sld [smem:[#allocation3 + $0xb3]]
    %s206 = sld [smem:[#allocation3 + $0xb4]]
    %s207 = sld [smem:[#allocation3 + $0xb5]]
    %s208 = sld [smem:[#allocation3 + $0xb6]]
    %s209 = sld [smem:[#allocation3 + $0xb7]]
    %s210 = sld [smem:[#allocation3 + $0xb8]]
    %s211 = sld [smem:[#allocation3 + $0xb9]]
    %s212 = sld [smem:[#allocation3 + $0xba]]
    %s213 = sld [smem:[#allocation3 + $0xbb]]
    %s214 = sld [smem:[#allocation3 + $0xbc]]
    %s215 = sld [smem:[#allocation3 + $0xbd]]
    %s216 = sld [smem:[#allocation3 + $0xbe]]
    %s217 = sld [smem:[#allocation3 + $0xbf]]
    %s218 = sld [smem:[#allocation3 + $0xc0]]
    %s219 = sld [smem:[#allocation3 + $0xc1]]
    %s220 = sld [smem:[#allocation3 + $0xc2]]
    %s221 = sld [smem:[#allocation3 + $0xc3]]
    %s222 = sld [smem:[#allocation3 + $0xc4]]
    %s223 = sld [smem:[#allocation3 + $0xc5]]
    %s224 = sld [smem:[#allocation3 + $0xc6]]
    %s225 = sld [smem:[#allocation3 + $0xc7]]
    %s226 = sld [smem:[#allocation3 + $0xc8]]
    %s227 = sld [smem:[#allocation3 + $0xc9]]
    %s228 = sld [smem:[#allocation3 + $0xca]]
    %s229 = sld [smem:[#allocation3 + $0xcb]]
    %s230 = sld [smem:[#allocation3 + $0xcc]]
    %s231 = sld [smem:[#allocation3 + $0xcd]]
    %s232 = sld [smem:[#allocation3 + $0xce]]
    %s233 = sld [smem:[#allocation3 + $0xcf]]
    %v234 = vld [vmem:[#allocation4] sm:$0xff]
    %v235 = vstv %s26
    %v236 = vmul.f32 %v235, %v234
    %v237 = vstv %s35
    %v238 = vadd.f32 %v236, %v237
    %v239 = vtanh.pop %v238
    %v240 = vstv %s27
    %v241 = vmul.f32 %v240, %v234
    %v242 = vstv %s36
    %v243 = vadd.f32 %v241, %v242
    %v244 = vtanh.pop %v243
    %v245 = vstv %s28
    %v246 = vmul.f32 %v245, %v234
    %v247 = vstv %s37
    %v248 = vadd.f32 %v246, %v247
    %v249 = vtanh.pop %v248
    %v250 = vstv %s29
    %v251 = vmul.f32 %v250, %v234
    %v252 = vstv %s38
    %v253 = vadd.f32 %v251, %v252
    %v254 = vtanh.pop %v253
    %v255 = vstv %s30
    %v256 = vmul.f32 %v255, %v234
    %v257 = vstv %s39
    %v258 = vadd.f32 %v256, %v257
    %v259 = vtanh.pop %v258
    %v260 = vstv %s31
    %v261 = vmul.f32 %v260, %v234
    %v262 = vstv %s40
    %v263 = vadd.f32 %v261, %v262
    %v264 = vtanh.pop %v263
    %v265 = vstv %s32
    %v266 = vmul.f32 %v265, %v234
    %v267 = vstv %s41
    %v268 = vadd.f32 %v266, %v267
    %v269 = vtanh.pop %v268
    %v270 = vstv %s33
    %v271 = vmul.f32 %v270, %v234
    %v272 = vstv %s42
    %v273 = vadd.f32 %v271, %v272
    %v274 = vtanh.pop %v273
    %v275 = vstv %s34
    %v276 = vmul.f32 %v275, %v234
    %v277 = vstv %s43
    %v278 = vadd.f32 %v276, %v277
    %v279 = vtanh.pop %v278
    %v280 = vstv %s44
    %v281 = vmul.f32 %v280, %v239
    %v282 = vstv %s45
    %v283 = vmul.f32 %v282, %v244
    %v284 = vadd.f32 %v281, %v283
    %v285 = vstv %s46
    %v286 = vmul.f32 %v285, %v249
    %v287 = vadd.f32 %v284, %v286
    %v288 = vstv %s47
    %v289 = vmul.f32 %v288, %v254
    %v290 = vadd.f32 %v287, %v289
    %v291 = vstv %s48
    %v292 = vmul.f32 %v291, %v259
    %v293 = vadd.f32 %v290, %v292
    %v294 = vstv %s49
    %v295 = vmul.f32 %v294, %v264
    %v296 = vadd.f32 %v293, %v295
    %v297 = vstv %s50
    %v298 = vmul.f32 %v297, %v269
    %v299 = vadd.f32 %v296, %v298
    %v300 = vstv %s51
    %v301 = vmul.f32 %v300, %v274
    %v302 = vadd.f32 %v299, %v301
    %v303 = vstv %s52
    %v304 = vmul.f32 %v303, %v279
    %v305 = vadd.f32 %v302, %v304
    %v306 = vstv %s125
    %v307 = vadd.f32 %v305, %v306
    %v308 = vtanh.pop %v307
    %v309 = vstv %s53
    %v310 = vmul.f32 %v309, %v239
    %v311 = vstv %s54
    %v312 = vmul.f32 %v311, %v244
    %v313 = vadd.f32 %v310, %v312
    %v314 = vstv %s55
    %v315 = vmul.f32 %v314, %v249
    %v316 = vadd.f32 %v313, %v315
    %v317 = vstv %s56
    %v318 = vmul.f32 %v317, %v254
    %v319 = vadd.f32 %v316, %v318
    %v320 = vstv %s57
    %v321 = vmul.f32 %v320, %v259
    %v322 = vadd.f32 %v319, %v321
    %v323 = vstv %s58
    %v324 = vmul.f32 %v323, %v264
    %v325 = vadd.f32 %v322, %v324
    %v326 = vstv %s59
    %v327 = vmul.f32 %v326, %v269
    %v328 = vadd.f32 %v325, %v327
    %v329 = vstv %s60
    %v330 = vmul.f32 %v329, %v274
    %v331 = vadd.f32 %v328, %v330
    %v332 = vstv %s61
    %v333 = vmul.f32 %v332, %v279
    %v334 = vadd.f32 %v331, %v333
    %v335 = vstv %s126
    %v336 = vadd.f32 %v334, %v335
    %v337 = vtanh.pop %v336
    %v338 = vstv %s62
    %v339 = vmul.f32 %v338, %v239
    %v340 = vstv %s63
    %v341 = vmul.f32 %v340, %v244
    %v342 = vadd.f32 %v339, %v341
    %v343 = vstv %s64
    %v344 = vmul.f32 %v343, %v249
    %v345 = vadd.f32 %v342, %v344
    %v346 = vstv %s65
    %v347 = vmul.f32 %v346, %v254
    %v348 = vadd.f32 %v345, %v347
    %v349 = vstv %s66
    %v350 = vmul.f32 %v349, %v259
    %v351 = vadd.f32 %v348, %v350
    %v352 = vstv %s67
    %v353 = vmul.f32 %v352, %v264
    %v354 = vadd.f32 %v351, %v353
    %v355 = vstv %s68
    %v356 = vmul.f32 %v355, %v269
    %v357 = vadd.f32 %v354, %v356
    %v358 = vstv %s69
    %v359 = vmul.f32 %v358, %v274
    %v360 = vadd.f32 %v357, %v359
    %v361 = vstv %s70
    %v362 = vmul.f32 %v361, %v279
    %v363 = vadd.f32 %v360, %v362
    %v364 = vstv %s127
    %v365 = vadd.f32 %v363, %v364
    %v366 = vtanh.pop %v365
    %v367 = vstv %s71
    %v368 = vmul.f32 %v367, %v239
    %v369 = vstv %s72
    %v370 = vmul.f32 %v369, %v244
    %v371 = vadd.f32 %v368, %v370
    %v372 = vstv %s73
    %v373 = vmul.f32 %v372, %v249
    %v374 = vadd.f32 %v371, %v373
    %v375 = vstv %s74
    %v376 = vmul.f32 %v375, %v254
    %v377 = vadd.f32 %v374, %v376
    %v378 = vstv %s75
    %v379 = vmul.f32 %v378, %v259
    %v380 = vadd.f32 %v377, %v379
    %v381 = vstv %s76
    %v382 = vmul.f32 %v381, %v264
    %v383 = vadd.f32 %v380, %v382
    %v384 = vstv %s77
    %v385 = vmul.f32 %v384, %v269
    %v386 = vadd.f32 %v383, %v385
    %v387 = vstv %s78
    %v388 = vmul.f32 %v387, %v274
    %v389 = vadd.f32 %v386, %v388
    %v390 = vstv %s79
    %v391 = vmul.f32 %v390, %v279
    %v392 = vadd.f32 %v389, %v391
    %v393 = vstv %s128
    %v394 = vadd.f32 %v392, %v393
    %v395 = vtanh.pop %v394
    %v396 = vstv %s80
    %v397 = vmul.f32 %v396, %v239
    %v398 = vstv %s81
    %v399 = vmul.f32 %v398, %v244
    %v400 = vadd.f32 %v397, %v399
    %v401 = vstv %s82
    %v402 = vmul.f32 %v401, %v249
    %v403 = vadd.f32 %v400, %v402
    %v404 = vstv %s83
    %v405 = vmul.f32 %v404, %v254
    %v406 = vadd.f32 %v403, %v405
    %v407 = vstv %s84
    %v408 = vmul.f32 %v407, %v259
    %v409 = vadd.f32 %v406, %v408
    %v410 = vstv %s85
    %v411 = vmul.f32 %v410, %v264
    %v412 = vadd.f32 %v409, %v411
    %v413 = vstv %s86
    %v414 = vmul.f32 %v413, %v269
    %v415 = vadd.f32 %v412, %v414
    %v416 = vstv %s87
    %v417 = vmul.f32 %v416, %v274
    %v418 = vadd.f32 %v415, %v417
    %v419 = vstv %s88
    %v420 = vmul.f32 %v419, %v279
    %v421 = vadd.f32 %v418, %v420
    %v422 = vstv %s129
    %v423 = vadd.f32 %v421, %v422
    %v424 = vtanh.pop %v423
    %v425 = vstv %s89
    %v426 = vmul.f32 %v425, %v239
    %v427 = vstv %s90
    %v428 = vmul.f32 %v427, %v244
    %v429 = vadd.f32 %v426, %v428
    %v430 = vstv %s91
    %v431 = vmul.f32 %v430, %v249
    %v432 = vadd.f32 %v429, %v431
    %v433 = vstv %s92
    %v434 = vmul.f32 %v433, %v254
    %v435 = vadd.f32 %v432, %v434
    %v436 = vstv %s93
    %v437 = vmul.f32 %v436, %v259
    %v438 = vadd.f32 %v435, %v437
    %v439 = vstv %s94
    %v440 = vmul.f32 %v439, %v264
    %v441 = vadd.f32 %v438, %v440
    %v442 = vstv %s95
    %v443 = vmul.f32 %v442, %v269
    %v444 = vadd.f32 %v441, %v443
    %v445 = vstv %s96
    %v446 = vmul.f32 %v445, %v274
    %v447 = vadd.f32 %v444, %v446
    %v448 = vstv %s97
    %v449 = vmul.f32 %v448, %v279
    %v450 = vadd.f32 %v447, %v449
    %v451 = vstv %s130
    %v452 = vadd.f32 %v450, %v451
    %v453 = vtanh.pop %v452
    %v454 = vstv %s98
    %v455 = vmul.f32 %v454, %v239
    %v456 = vstv %s99
    %v457 = vmul.f32 %v456, %v244
    %v458 = vadd.f32 %v455, %v457
    %v459 = vstv %s100
    %v460 = vmul.f32 %v459, %v249
    %v461 = vadd.f32 %v458, %v460
    %v462 = vstv %s101
    %v463 = vmul.f32 %v462, %v254
    %v464 = vadd.f32 %v461, %v463
    %v465 = vstv %s102
    %v466 = vmul.f32 %v465, %v259
    %v467 = vadd.f32 %v464, %v466
    %v468 = vstv %s103
    %v469 = vmul.f32 %v468, %v264
    %v470 = vadd.f32 %v467, %v469
    %v471 = vstv %s104
    %v472 = vmul.f32 %v471, %v269
    %v473 = vadd.f32 %v470, %v472
    %v474 = vstv %s105
    %v475 = vmul.f32 %v474, %v274
    %v476 = vadd.f32 %v473, %v475
    %v477 = vstv %s106
    %v478 = vmul.f32 %v477, %v279
    %v479 = vadd.f32 %v476, %v478
    %v480 = vstv %s131
    %v481 = vadd.f32 %v479, %v480
    %v482 = vtanh.pop %v481
    %v483 = vstv %s107
    %v484 = vmul.f32 %v483, %v239
    %v485 = vstv %s108
    %v486 = vmul.f32 %v485, %v244
    %v487 = vadd.f32 %v484, %v486
    %v488 = vstv %s109
    %v489 = vmul.f32 %v488, %v249
    %v490 = vadd.f32 %v487, %v489
    %v491 = vstv %s110
    %v492 = vmul.f32 %v491, %v254
    %v493 = vadd.f32 %v490, %v492
    %v494 = vstv %s111
    %v495 = vmul.f32 %v494, %v259
    %v496 = vadd.f32 %v493, %v495
    %v497 = vstv %s112
    %v498 = vmul.f32 %v497, %v264
    %v499 = vadd.f32 %v496, %v498
    %v500 = vstv %s113
    %v501 = vmul.f32 %v500, %v269
    %v502 = vadd.f32 %v499, %v501
    %v503 = vstv %s114
    %v504 = vmul.f32 %v503, %v274
    %v505 = vadd.f32 %v502, %v504
    %v506 = vstv %s115
    %v507 = vmul.f32 %v506, %v279
    %v508 = vadd.f32 %v505, %v507
    %v509 = vstv %s132
    %v510 = vadd.f32 %v508, %v509
    %v511 = vtanh.pop %v510
    %v512 = vstv %s116
    %v513 = vmul.f32 %v512, %v239
    %v514 = vstv %s117
    %v515 = vmul.f32 %v514, %v244
    %v516 = vadd.f32 %v513, %v515
    %v517 = vstv %s118
    %v518 = vmul.f32 %v517, %v249
    %v519 = vadd.f32 %v516, %v518
    %v520 = vstv %s119
    %v521 = vmul.f32 %v520, %v254
    %v522 = vadd.f32 %v519, %v521
    %v523 = vstv %s120
    %v524 = vmul.f32 %v523, %v259
    %v525 = vadd.f32 %v522, %v524
    %v526 = vstv %s121
    %v527 = vmul.f32 %v526, %v264
    %v528 = vadd.f32 %v525, %v527
    %v529 = vstv %s122
    %v530 = vmul.f32 %v529, %v269
    %v531 = vadd.f32 %v528, %v530
    %v532 = vstv %s123
    %v533 = vmul.f32 %v532, %v274
    %v534 = vadd.f32 %v531, %v533
    %v535 = vstv %s124
    %v536 = vmul.f32 %v535, %v279
    %v537 = vadd.f32 %v534, %v536
    %v538 = vstv %s133
    %v539 = vadd.f32 %v537, %v538
    %v540 = vtanh.pop %v539
    %v541 = vstv %s134
    %v542 = vmul.f32 %v541, %v308
    %v543 = vstv %s135
    %v544 = vmul.f32 %v543, %v337
    %v545 = vadd.f32 %v542, %v544
    %v546 = vstv %s136
    %v547 = vmul.f32 %v546, %v366
    %v548 = vadd.f32 %v545, %v547
    %v549 = vstv %s137
    %v550 = vmul.f32 %v549, %v395
    %v551 = vadd.f32 %v548, %v550
    %v552 = vstv %s138
    %v553 = vmul.f32 %v552, %v424
    %v554 = vadd.f32 %v551, %v553
    %v555 = vstv %s139
    %v556 = vmul.f32 %v555, %v453
    %v557 = vadd.f32 %v554, %v556
    %v558 = vstv %s140
    %v559 = vmul.f32 %v558, %v482
    %v560 = vadd.f32 %v557, %v559
    %v561 = vstv %s141
    %v562 = vmul.f32 %v561, %v511
    %v563 = vadd.f32 %v560, %v562
    %v564 = vstv %s142
    %v565 = vmul.f32 %v564, %v540
    %v566 = vadd.f32 %v563, %v565
    %v567 = vstv %s215
    %v568 = vadd.f32 %v566, %v567
    %v569 = vtanh.pop %v568
    %v570 = vstv %s143
    %v571 = vmul.f32 %v570, %v308
    %v572 = vstv %s144
    %v573 = vmul.f32 %v572, %v337
    %v574 = vadd.f32 %v571, %v573
    %v575 = vstv %s145
    %v576 = vmul.f32 %v575, %v366
    %v577 = vadd.f32 %v574, %v576
    %v578 = vstv %s146
    %v579 = vmul.f32 %v578, %v395
    %v580 = vadd.f32 %v577, %v579
    %v581 = vstv %s147
    %v582 = vmul.f32 %v581, %v424
    %v583 = vadd.f32 %v580, %v582
    %v584 = vstv %s148
    %v585 = vmul.f32 %v584, %v453
    %v586 = vadd.f32 %v583, %v585
    %v587 = vstv %s149
    %v588 = vmul.f32 %v587, %v482
    %v589 = vadd.f32 %v586, %v588
    %v590 = vstv %s150
    %v591 = vmul.f32 %v590, %v511
    %v592 = vadd.f32 %v589, %v591
    %v593 = vstv %s151
    %v594 = vmul.f32 %v593, %v540
    %v595 = vadd.f32 %v592, %v594
    %v596 = vstv %s216
    %v597 = vadd.f32 %v595, %v596
    %v598 = vtanh.pop %v597
    %v599 = vstv %s152
    %v600 = vmul.f32 %v599, %v308
    %v601 = vstv %s153
    %v602 = vmul.f32 %v601, %v337
    %v603 = vadd.f32 %v600, %v602
    %v604 = vstv %s154
    %v605 = vmul.f32 %v604, %v366
    %v606 = vadd.f32 %v603, %v605
    %v607 = vstv %s155
    %v608 = vmul.f32 %v607, %v395
    %v609 = vadd.f32 %v606, %v608
    %v610 = vstv %s156
    %v611 = vmul.f32 %v610, %v424
    %v612 = vadd.f32 %v609, %v611
    %v613 = vstv %s157
    %v614 = vmul.f32 %v613, %v453
    %v615 = vadd.f32 %v612, %v614
    %v616 = vstv %s158
    %v617 = vmul.f32 %v616, %v482
    %v618 = vadd.f32 %v615, %v617
    %v619 = vstv %s159
    %v620 = vmul.f32 %v619, %v511
    %v621 = vadd.f32 %v618, %v620
    %v622 = vstv %s160
    %v623 = vmul.f32 %v622, %v540
    %v624 = vadd.f32 %v621, %v623
    %v625 = vstv %s217
    %v626 = vadd.f32 %v624, %v625
    %v627 = vtanh.pop %v626
    %v628 = vstv %s161
    %v629 = vmul.f32 %v628, %v308
    %v630 = vstv %s162
    %v631 = vmul.f32 %v630, %v337
    %v632 = vadd.f32 %v629, %v631
    %v633 = vstv %s163
    %v634 = vmul.f32 %v633, %v366
    %v635 = vadd.f32 %v632, %v634
    %v636 = vstv %s164
    %v637 = vmul.f32 %v636, %v395
    %v638 = vadd.f32 %v635, %v637
    %v639 = vstv %s165
    %v640 = vmul.f32 %v639, %v424
    %v641 = vadd.f32 %v638, %v640
    %v642 = vstv %s166
    %v643 = vmul.f32 %v642, %v453
    %v644 = vadd.f32 %v641, %v643
    %v645 = vstv %s167
    %v646 = vmul.f32 %v645, %v482
    %v647 = vadd.f32 %v644, %v646
    %v648 = vstv %s168
    %v649 = vmul.f32 %v648, %v511
    %v650 = vadd.f32 %v647, %v649
    %v651 = vstv %s169
    %v652 = vmul.f32 %v651, %v540
    %v653 = vadd.f32 %v650, %v652
    %v654 = vstv %s218
    %v655 = vadd.f32 %v653, %v654
    %v656 = vtanh.pop %v655
    %v657 = vstv %s170
    %v658 = vmul.f32 %v657, %v308
    %v659 = vstv %s171
    %v660 = vmul.f32 %v659, %v337
    %v661 = vadd.f32 %v658, %v660
    %v662 = vstv %s172
    %v663 = vmul.f32 %v662, %v366
    %v664 = vadd.f32 %v661, %v663
    %v665 = vstv %s173
    %v666 = vmul.f32 %v665, %v395
    %v667 = vadd.f32 %v664, %v666
    %v668 = vstv %s174
    %v669 = vmul.f32 %v668, %v424
    %v670 = vadd.f32 %v667, %v669
    %v671 = vstv %s175
    %v672 = vmul.f32 %v671, %v453
    %v673 = vadd.f32 %v670, %v672
    %v674 = vstv %s176
    %v675 = vmul.f32 %v674, %v482
    %v676 = vadd.f32 %v673, %v675
    %v677 = vstv %s177
    %v678 = vmul.f32 %v677, %v511
    %v679 = vadd.f32 %v676, %v678
    %v680 = vstv %s178
    %v681 = vmul.f32 %v680, %v540
    %v682 = vadd.f32 %v679, %v681
    %v683 = vstv %s219
    %v684 = vadd.f32 %v682, %v683
    %v685 = vtanh.pop %v684
    %v686 = vstv %s179
    %v687 = vmul.f32 %v686, %v308
    %v688 = vstv %s180
    %v689 = vmul.f32 %v688, %v337
    %v690 = vadd.f32 %v687, %v689
    %v691 = vstv %s181
    %v692 = vmul.f32 %v691, %v366
    %v693 = vadd.f32 %v690, %v692
    %v694 = vstv %s182
    %v695 = vmul.f32 %v694, %v395
    %v696 = vadd.f32 %v693, %v695
    %v697 = vstv %s183
    %v698 = vmul.f32 %v697, %v424
    %v699 = vadd.f32 %v696, %v698
    %v700 = vstv %s184
    %v701 = vmul.f32 %v700, %v453
    %v702 = vadd.f32 %v699, %v701
    %v703 = vstv %s185
    %v704 = vmul.f32 %v703, %v482
    %v705 = vadd.f32 %v702, %v704
    %v706 = vstv %s186
    %v707 = vmul.f32 %v706, %v511
    %v708 = vadd.f32 %v705, %v707
    %v709 = vstv %s187
    %v710 = vmul.f32 %v709, %v540
    %v711 = vadd.f32 %v708, %v710
    %v712 = vstv %s220
    %v713 = vadd.f32 %v711, %v712
    %v714 = vtanh.pop %v713
    %v715 = vstv %s188
    %v716 = vmul.f32 %v715, %v308
    %v717 = vstv %s189
    %v718 = vmul.f32 %v717, %v337
    %v719 = vadd.f32 %v716, %v718
    %v720 = vstv %s190
    %v721 = vmul.f32 %v720, %v366
    %v722 = vadd.f32 %v719, %v721
    %v723 = vstv %s191
    %v724 = vmul.f32 %v723, %v395
    %v725 = vadd.f32 %v722, %v724
    %v726 = vstv %s192
    %v727 = vmul.f32 %v726, %v424
    %v728 = vadd.f32 %v725, %v727
    %v729 = vstv %s193
    %v730 = vmul.f32 %v729, %v453
    %v731 = vadd.f32 %v728, %v730
    %v732 = vstv %s194
    %v733 = vmul.f32 %v732, %v482
    %v734 = vadd.f32 %v731, %v733
    %v735 = vstv %s195
    %v736 = vmul.f32 %v735, %v511
    %v737 = vadd.f32 %v734, %v736
    %v738 = vstv %s196
    %v739 = vmul.f32 %v738, %v540
    %v740 = vadd.f32 %v737, %v739
    %v741 = vstv %s221
    %v742 = vadd.f32 %v740, %v741
    %v743 = vtanh.pop %v742
    %v744 = vstv %s197
    %v745 = vmul.f32 %v744, %v308
    %v746 = vstv %s198
    %v747 = vmul.f32 %v746, %v337
    %v748 = vadd.f32 %v745, %v747
    %v749 = vstv %s199
    %v750 = vmul.f32 %v749, %v366
    %v751 = vadd.f32 %v748, %v750
    %v752 = vstv %s200
    %v753 = vmul.f32 %v752, %v395
    %v754 = vadd.f32 %v751, %v753
    %v755 = vstv %s201
    %v756 = vmul.f32 %v755, %v424
    %v757 = vadd.f32 %v754, %v756
    %v758 = vstv %s202
    %v759 = vmul.f32 %v758, %v453
    %v760 = vadd.f32 %v757, %v759
    %v761 = vstv %s203
    %v762 = vmul.f32 %v761, %v482
    %v763 = vadd.f32 %v760, %v762
    %v764 = vstv %s204
    %v765 = vmul.f32 %v764, %v511
    %v766 = vadd.f32 %v763, %v765
    %v767 = vstv %s205
    %v768 = vmul.f32 %v767, %v540
    %v769 = vadd.f32 %v766, %v768
    %v770 = vstv %s222
    %v771 = vadd.f32 %v769, %v770
    %v772 = vtanh.pop %v771
    %v773 = vstv %s206
    %v774 = vmul.f32 %v773, %v308
    %v775 = vstv %s207
    %v776 = vmul.f32 %v775, %v337
    %v777 = vadd.f32 %v774, %v776
    %v778 = vstv %s208
    %v779 = vmul.f32 %v778, %v366
    %v780 = vadd.f32 %v777, %v779
    %v781 = vstv %s209
    %v782 = vmul.f32 %v781, %v395
    %v783 = vadd.f32 %v780, %v782
    %v784 = vstv %s210
    %v785 = vmul.f32 %v784, %v424
    %v786 = vadd.f32 %v783, %v785
    %v787 = vstv %s211
    %v788 = vmul.f32 %v787, %v453
    %v789 = vadd.f32 %v786, %v788
    %v790 = vstv %s212
    %v791 = vmul.f32 %v790, %v482
    %v792 = vadd.f32 %v789, %v791
    %v793 = vstv %s213
    %v794 = vmul.f32 %v793, %v511
    %v795 = vadd.f32 %v792, %v794
    %v796 = vstv %s214
    %v797 = vmul.f32 %v796, %v540
    %v798 = vadd.f32 %v795, %v797
    %v799 = vstv %s223
    %v800 = vadd.f32 %v798, %v799
    %v801 = vtanh.pop %v800
    %v802 = vstv %s224
    %v803 = vmul.f32 %v802, %v569
    %v804 = vstv %s225
    %v805 = vmul.f32 %v804, %v598
    %v806 = vadd.f32 %v803, %v805
    %v807 = vstv %s226
    %v808 = vmul.f32 %v807, %v627
    %v809 = vadd.f32 %v806, %v808
    %v810 = vstv %s227
    %v811 = vmul.f32 %v810, %v656
    %v812 = vadd.f32 %v809, %v811
    %v813 = vstv %s228
    %v814 = vmul.f32 %v813, %v685
    %v815 = vadd.f32 %v812, %v814
    %v816 = vstv %s229
    %v817 = vmul.f32 %v816, %v714
    %v818 = vadd.f32 %v815, %v817
    %v819 = vstv %s230
    %v820 = vmul.f32 %v819, %v743
    %v821 = vadd.f32 %v818, %v820
    %v822 = vstv %s231
    %v823 = vmul.f32 %v822, %v772
    %v824 = vadd.f32 %v821, %v823
    %v825 = vstv %s232
    %v826 = vmul.f32 %v825, %v801
    %v827 = vadd.f32 %v824, %v826
    %v828 = vstv %s233
    %v829 = vadd.f32 %v827, %v828
    %830 = vst [vmem:[#allocation7] sm:$0xff] %v829
    // Predicated region
    $region10: #{tpu_custom_call.1} parent=1 // pred_check
      _
    $region11: #{tpu_custom_call.1} parent=1 // pred_check_branch
      %832 = sbr.rel (0) target = $region13
    $region12: #{tpu_custom_call.1} parent=1 // pred_region
      %s834 = ssub.s32 128, 128
      %835 = vsyncadd [#allocation6], %s834
      %s837 = sshll.u32 [#allocation7], 4
      %s838 = int_to_ptr.vmem [resolvable:$true] %s837
      %840 = dma.vmem_to_hbm [thread:$0]  %s838, 128, %s2, [#allocation6]
    $region13: #{tpu_custom_call.1} parent=1 // pred_fallthru
      _
    // Predicated region
    $region14: #{tpu_custom_call.1} parent=1 // pred_check
      _
    $region15: #{tpu_custom_call.1} parent=1 // pred_check_branch
      %842 = sbr.rel (0) target = $region17
    $region16: #{tpu_custom_call.1} parent=1 // pred_region
      %843 = dma.done [#allocation6], 128
    $region17: #{tpu_custom_call.1} parent=1 // pred_fallthru
      _
    %844 = vsyncpa [#allocation5], 1
    %845 = vsyncpa [#allocation6], 1

</llo_original>
